<compile_context>
chip_gen: v5e
topology: v5e:2x2
jax: 0.10.0
libtpu: 0.0.40
codegen_flags: <defaults>
</compile_context>

<pallas_src>
import numpy as np
import jax
import jax.numpy as jnp
from jax.experimental import pallas as pl
from jax.experimental.pallas import tpu as pltpu

# ---------------- small, module-consistent hyper-parameters -----------------
HIDDEN = 32        # hidden_dim (100 in the original)
SEN_MAXL = 8       # sen_maxl   (50 in the original)
VOCAB = 50         # vocab_size (80000 in the original); table has VOCAB+2 rows
LENGTHS = [2, 3]   # sentences per sample (ragged, like job_pool/geek_pool)

# Encoder sentence-block cap.  TODO(synk): at production L=50/H=128 cap ~128 on
# v7x (64 MiB VMEM) vs ~256 on v5e/v6e (128 MiB), and raise vmem_limit_bytes.
ENC_NB_CAP = 256
# Classifier batch tile (lane-dense output width).
CLA_TB = 128


def _round_up(x, m):
    return ((x + m - 1) // m) * m


# ============================ Pallas kernels =================================

def encoder_kernel(x_ref, w1_ref, b1_ref, w2_ref, b2_ref, out_ref):
    """One encoder (grid axis 0 picks G_enc/J_enc weights), NB sentences/step.

    Conv2d(1->H,(5,H),pad(2,0))+ReLU, (permute), Conv2d(1->H,(3,H),pad(1,0))
    +ReLU, max over the sequence.  Each conv is one MXU matmul against a
    shifted-window slab; the input arrives pre-padded on the sequence axis so
    the 5-tap slab is built from static slices (no fresh zeros).
    """
    xp = x_ref[0]                                 # (NB, L+4, H) bf16, pre-padded
    nb, lp, H = xp.shape
    L = lp - 4

    # conv1: h1[t, c] = relu(b1[c] + sum_k emb[t+k-2, :] @ w1[k][:, c])
    slab1 = jnp.concatenate([xp[:, s:s + L, :] for s in range(5)], axis=-1)
    slab1 = slab1.reshape(nb * L, 5 * H)
    h1 = jnp.dot(slab1, w1_ref[0], preferred_element_type=jnp.float32) + b1_ref[0]
    h1 = jnp.maximum(h1, 0.0).reshape(nb, L, H)

    # (torch permute(0,3,2,1) just moves conv1 channels into the "embedding"
    # slot)  conv2: h2[t, c] = relu(b2[c] + sum_k h1[t+k-1, :] @ w2[k][:, c])
    zrow = jnp.zeros((nb, 1, H), h1.dtype)
    h1p = jnp.concatenate([zrow, h1, zrow], axis=1).astype(jnp.bfloat16)
    slab2 = jnp.concatenate([h1p[:, s:s + L, :] for s in range(3)], axis=-1)
    slab2 = slab2.reshape(nb * L, 3 * H)
    h2 = jnp.dot(slab2, w2_ref[0], preferred_element_type=jnp.float32) + b2_ref[0]
    h2 = jnp.maximum(h2, 0.0).reshape(nb, L, H)

    # max_pool2d(kernel=(sen_maxl, 1)) -> max over the sequence axis
    out_ref[0] = jnp.max(h2, axis=1)              # (NB, H)


def encode_all_sentences(params, ids_geek, ids_job):
    """Both encoders in ONE pallas_call.

    ids_*: (N, L) int32 token ids (geek side encoded by G_enc, job side by
    J_enc).  Returns (sen_geek, sen_job), each (N, H) float32.
    """
    H = HIDDEN
    assert ids_geek.shape == ids_job.shape
    N, L = ids_geek.shape

    # TODO(synk): at production scale fuse this gather into the encoder kernel
    # (PrefetchScalarGridSpec + pl.Element row indexing / manual DMA gather) to
    # avoid the HBM round trip of the (N, L, H) embedded activations.
    emb_g = jnp.take(params["G_enc"]["emb"], ids_geek, axis=0)
    emb_j = jnp.take(params["J_enc"]["emb"], ids_job, axis=0)
    emb = jnp.stack([emb_g, emb_j], axis=0).astype(jnp.bfloat16)   # (2, N, L, H)
    # Pre-pad the sequence axis by 2 on each side -> conv1 taps become static
    # in-kernel slices of the loaded block.
    emb = jnp.pad(emb, ((0, 0), (0, 0), (2, 2), (0, 0)))
    Lp = L + 4

    NB = min(_round_up(N, 8), ENC_NB_CAP)
    Np = _round_up(N, NB)
    if Np != N:
        emb = jnp.pad(emb, ((0, 0), (0, Np - N), (0, 0), (0, 0)))

    enc_keys = ("G_enc", "J_enc")
    w1f = jnp.stack([params[e]["w1"].reshape(5 * H, H) for e in enc_keys]
                    ).astype(jnp.bfloat16)                          # (2, 5H, H)
    b1 = jnp.stack([params[e]["b1"] for e in enc_keys])             # (2, 1, H)
    w2f = jnp.stack([params[e]["w2"].reshape(3 * H, H) for e in enc_keys]
                    ).astype(jnp.bfloat16)                          # (2, 3H, H)
    b2 = jnp.stack([params[e]["b2"] for e in enc_keys])             # (2, 1, H)

    # TODO(synk): weight specs are invariant along the block axis; mark them
    # pipeline_mode=pl.Buffered(1) once single-buffering is needed for VMEM.
    out = pl.pallas_call(
        encoder_kernel,
        out_shape=jax.ShapeDtypeStruct((2, Np, H), jnp.float32),
        grid=(2, Np // NB),
        in_specs=[
            pl.BlockSpec((1, NB, Lp, H), lambda e, i: (e, i, 0, 0)),
            pl.BlockSpec((1, 5 * H, H), lambda e, i: (e, 0, 0)),
            pl.BlockSpec((1, 1, H), lambda e, i: (e, 0, 0)),
            pl.BlockSpec((1, 3 * H, H), lambda e, i: (e, 0, 0)),
            pl.BlockSpec((1, 1, H), lambda e, i: (e, 0, 0)),
        ],
        out_specs=pl.BlockSpec((1, NB, H), lambda e, i: (e, i, 0)),
        compiler_params=pltpu.CompilerParams(
            dimension_semantics=("parallel", "parallel"),
            vmem_limit_bytes=32 * 1024 * 1024),
    )(emb, w1f, b1, w2f, b2)
    return out[0, :N], out[1, :N]


def classifier_kernel(g_ref, j_ref, wbil_ref, bbil_ref, wlin_ref, blin_ref,
                      out_ref):
    """All three classifiers (G/J/M) for one batch tile of (geek, job) pairs.

    Bilinear(H,H->H): outer-product slab P (built in VMEM, never in HBM) times
    the concatenated (H*H, 3H) bilinear weight -> Sigmoid -> the three
    Linear(H->1) heads as one block-diagonal (3, 3H) matmul -> Sigmoid.
    Output is produced directly in (3, TB) orientation (lane-dense store).
    """
    H = g_ref.shape[1]
    g = g_ref[...].astype(jnp.bfloat16)            # (TB, H)
    jb = j_ref[...].astype(jnp.bfloat16)           # (TB, H)

    # P[b, i*H + j] = g[b, i] * job[b, j]
    P = jnp.concatenate([g[:, i:i + 1] * jb for i in range(H)], axis=-1)

    mix = jnp.dot(P, wbil_ref[...],
                  preferred_element_type=jnp.float32) + bbil_ref[...]  # (TB, 3H)
    mix = jax.nn.sigmoid(mix)

    # score[c, b] = sum_k wlin_bd[c, k] * mix[b, k]   (block-diagonal heads)
    score = jax.lax.dot_general(
        wlin_ref[...], mix,
        dimension_numbers=(((1,), (1,)), ((), ())),
        preferred_element_type=jnp.float32)                           # (3, TB)
    out_ref[...] = jax.nn.sigmoid(score + blin_ref[...])


def classifiers_pallas(geek, job, wbil_cat, bbil_cat, wlin_bd, blin_col):
    """geek/job: (Bt, H) stacked doc pairs.  Returns scores (3, Bt): [G, J, M]."""
    Bt, H = geek.shape
    TB = CLA_TB
    Bp = _round_up(max(Bt, TB), TB)
    pad = Bp - Bt
    if pad:
        z = jnp.zeros((pad, H), geek.dtype)
        geek = jnp.concatenate([geek, z], axis=0)
        job = jnp.concatenate([job, z], axis=0)
    out = pl.pallas_call(
        classifier_kernel,
        out_shape=jax.ShapeDtypeStruct((3, Bp), jnp.float32),
        grid=(Bp // TB,),
        in_specs=[
            pl.BlockSpec((TB, H), lambda i: (i, 0)),
            pl.BlockSpec((TB, H), lambda i: (i, 0)),
            pl.BlockSpec((H * H, 3 * H), lambda i: (0, 0)),
            pl.BlockSpec((1, 3 * H), lambda i: (0, 0)),
            pl.BlockSpec((3, 3 * H), lambda i: (0, 0)),
            pl.BlockSpec((3, 1), lambda i: (0, 0)),
        ],
        out_specs=pl.BlockSpec((3, TB), lambda i: (0, i)),
        compiler_params=pltpu.CompilerParams(
            dimension_semantics=("parallel",),
            vmem_limit_bytes=32 * 1024 * 1024),
    )(geek, job, wbil_cat, bbil_cat, wlin_bd, blin_col)
    return out[:, :Bt]


# ============================ plain-JAX glue =================================

def stacked_cla_weights(params):
    H = HIDDEN
    keys = ("G_cla", "J_cla", "M_cla")
    wbil_cat = jnp.concatenate(
        [params[k]["wbil"].reshape(H * H, H) for k in keys], axis=1
    ).astype(jnp.bfloat16)                                   # (H*H, 3H)
    bbil_cat = jnp.concatenate([params[k]["bbil"] for k in keys], axis=1)  # (1, 3H)
    wlin_bd = jnp.zeros((3, 3 * H), jnp.float32)             # block-diagonal heads
    for c, k in enumerate(keys):
        wlin_bd = wlin_bd.at[c, c * H:(c + 1) * H].set(params[k]["wlin"][0])
    blin_col = jnp.concatenate([params[k]["blin"] for k in keys], axis=0)  # (3, 1)
    return wbil_cat, bbil_cat, wlin_bd, blin_col


def segment_pool(sen, lengths, n_names, job):
    """Ragged per-sample pooling over sentences as one segment op."""
    B = len(lengths)
    seg = np.concatenate(
        [ni * B + np.repeat(np.arange(B), lengths) for ni in range(n_names)])
    seg = jnp.asarray(seg, jnp.int32)
    nd = n_names * B
    if job:
        return jax.ops.segment_max(sen, seg, num_segments=nd)
    counts = jnp.asarray(np.tile(np.asarray(lengths, np.float32), n_names))
    return jax.ops.segment_sum(sen, seg, num_segments=nd) / counts[:, None]


def cal_c3_loss(p, p_m, index):
    p_0 = 1.0 - p
    p_1 = p * p_m
    p_2 = p * (1.0 - p_m)
    p_final = jnp.stack([p_0, p_1, p_2], axis=1)             # (B, 3, 1)
    # NOTE: torch f.softmax with no dim on a 3-D tensor uses legacy dim=0.
    p_final = jax.nn.softmax(p_final, axis=0)
    return -jnp.mean(jnp.log(p_final[:, index]))


def cal_c4_loss(p_g, p_m, p_j, index):
    p_0 = p_g * (1.0 - p_m)
    p_1 = p_g * p_m
    p_2 = p_j * (1.0 - p_m)
    p_3 = p_j * p_m
    p_final = jnp.stack([p_0, p_1, p_2, p_3], axis=1)        # (B, 4, 1)
    p_final = jax.nn.softmax(p_final, axis=0)                # legacy dim=0
    return -jnp.mean(jnp.log(p_final[:, index]))


def gj_net_forward(params, batches, lengths, train=True):
    B = len(lengths)
    g_names = ["g_0_g", "g_1_g", "g_2_g", "j_0_g", "j_1_g", "j_2_g"]
    j_names = ["g_0_j", "g_1_j", "g_2_j", "j_0_j", "j_1_j", "j_2_j"]
    n_names = len(g_names)

    # ONE encoder pallas_call for all 12 token batches (both weight sets).
    ids_g = jnp.concatenate([batches[n] for n in g_names], axis=0)
    ids_j = jnp.concatenate([batches[n] for n in j_names], axis=0)
    sen_g, sen_j = encode_all_sentences(params, ids_g, ids_j)

    # Ragged pooling as single segment ops (geek=mean, job=max).
    geek_all = segment_pool(sen_g, lengths, n_names, job=False)   # (6B, H)
    job_all = segment_pool(sen_j, lengths, n_names, job=True)     # (6B, H)

    # ONE classifier pallas_call for all (pair, classifier) combinations.
    wbil_cat, bbil_cat, wlin_bd, blin_col = stacked_cla_weights(params)
    scores = classifiers_pallas(geek_all, job_all,
                                wbil_cat, bbil_cat, wlin_bd, blin_col)  # (3, 6B)

    Gc, Jc, Mc = 0, 1, 2

    def s(ci, pi):
        return scores[ci, pi * B:(pi + 1) * B][:, None]              # (B, 1)

    pg_g_0, pm_g_0 = s(Gc, 0), s(Mc, 0)
    pg_g_1, pm_g_1, pj_g_1 = s(Gc, 1), s(Mc, 1), s(Jc, 1)
    pg_g_2, pm_g_2, pj_g_2 = s(Gc, 2), s(Mc, 2), s(Jc, 2)
    pj_j_0, pm_j_0 = s(Jc, 3), s(Mc, 3)
    pg_j_1, pm_j_1, pj_j_1 = s(Gc, 4), s(Mc, 4), s(Jc, 4)
    pg_j_2, pm_j_2, pj_j_2 = s(Gc, 5), s(Mc, 5), s(Jc, 5)

    if not train:
        geek_intent = [pg_g_0, pg_g_1, pg_g_2]
        match = [pm_g_1, pm_j_1, pm_g_2, pm_j_2]
        job_intent = [pj_j_0, pj_j_1, pj_j_2]
        return geek_intent, match, job_intent

    loss_g = -(jnp.mean(jnp.log(1.0 - pg_g_0))
               + (jnp.mean(jnp.log(pg_g_1)) + jnp.mean(jnp.log(pg_g_2))) / 2.0)
    loss_j = -(jnp.mean(jnp.log(1.0 - pj_j_0))
               + (jnp.mean(jnp.log(pj_j_1)) + jnp.mean(jnp.log(pj_j_2))) / 2.0)
    loss_m = -(jnp.mean(jnp.log(1.0 - pm_g_1)) + jnp.mean(jnp.log(1.0 - pm_j_1))
               + jnp.mean(jnp.log(pm_g_2)) + jnp.mean(jnp.log(pm_j_2)))
    loss_g3 = (cal_c3_loss(pg_g_0, pm_g_0, 0) + cal_c3_loss(pg_g_1, pm_g_1, 1)
               + cal_c3_loss(pg_g_2, pm_g_2, 2))
    loss_j3 = (cal_c3_loss(pj_j_0, pm_j_0, 0) + cal_c3_loss(pj_j_1, pm_j_1, 1)
               + cal_c3_loss(pj_j_2, pm_j_2, 2))
    loss_m4 = (cal_c4_loss(pg_g_1, pm_g_1, pj_g_1, 0)
               + cal_c4_loss(pg_g_2, pm_g_2, pj_g_2, 1)
               + cal_c4_loss(pg_j_1, pm_j_1, pj_j_1, 2)
               + cal_c4_loss(pg_j_2, pm_j_2, pj_j_2, 3))
    Loss = loss_g + loss_j + loss_m
    return Loss, loss_g, loss_j, loss_m, loss_g3, loss_j3, loss_m4


# ====================== deterministic parameter init ========================

def init_params(key):
    ks = jax.random.split(key, 5)

    def enc_params(k):
        k1, k2, k3, k4, k5 = jax.random.split(k, 5)
        emb = jax.random.normal(k1, (VOCAB + 2, HIDDEN), jnp.float32) * 0.5
        emb = emb.at[0].set(0.0)                      # padding_idx=0
        # w1[k, d_in, c_out] == torch Conv2d.weight[c_out, 0, k, d_in]
        w1 = jax.random.normal(k2, (5, HIDDEN, HIDDEN), jnp.float32) * 0.05
        b1 = jax.random.normal(k3, (1, HIDDEN), jnp.float32) * 0.05
        w2 = jax.random.normal(k4, (3, HIDDEN, HIDDEN), jnp.float32) * 0.05
        b2 = jax.random.normal(k5, (1, HIDDEN), jnp.float32) * 0.05
        return dict(emb=emb, w1=w1, b1=b1, w2=w2, b2=b2)

    def cla_params(k):
        k1, k2, k3, k4 = jax.random.split(k, 4)
        # wbil[i, j, o] == torch Bilinear.weight[o, i, j]
        wbil = jax.random.normal(k1, (HIDDEN, HIDDEN, HIDDEN), jnp.float32) * 0.02
        bbil = jax.random.normal(k2, (1, HIDDEN), jnp.float32) * 0.02
        wlin = jax.random.normal(k3, (1, HIDDEN), jnp.float32) * 0.1
        blin = jax.random.normal(k4, (1, 1), jnp.float32) * 0.1
        return dict(wbil=wbil, bbil=bbil, wlin=wlin, blin=blin)

    return dict(G_enc=enc_params(ks[0]), J_enc=enc_params(ks[1]),
                G_cla=cla_params(ks[2]), J_cla=cla_params(ks[3]),
                M_cla=cla_params(ks[4]))


# ============================ numpy references ===============================

def ref_encode_np(emb, w1, b1, w2, b2):
    N, L, H = emb.shape
    xp = np.pad(emb, ((0, 0), (2, 2), (0, 0)))
    h1 = np.zeros((N, L, H)) + b1
    for k in range(5):
        h1 += xp[:, k:k + L, :] @ w1[k]
    h1 = np.maximum(h1, 0.0)
    h1p = np.pad(h1, ((0, 0), (1, 1), (0, 0)))
    h2 = np.zeros((N, L, H)) + b2
    for k in range(3):
        h2 += h1p[:, k:k + L, :] @ w2[k]
    h2 = np.maximum(h2, 0.0)
    return h2.max(axis=1)


def ref_classifier_np(g, j, wbil, bbil, wlin, blin):
    mix = np.einsum('bi,ijo,bj->bo', g, wbil, j) + bbil
    mix = 1.0 / (1.0 + np.exp(-mix))
    score = mix @ wlin.T + blin
    return 1.0 / (1.0 + np.exp(-score))


# ================================== main =====================================

if __name__ == "__main__":
    key = jax.random.PRNGKey(0)
    pkey, dkey = jax.random.split(key)
    params = init_params(pkey)

    names = ["g_0_g", "g_0_j", "g_1_g", "g_1_j", "g_2_g", "g_2_j",
             "j_0_g", "j_0_j", "j_1_g", "j_1_j", "j_2_g", "j_2_j"]
    n_sent = sum(LENGTHS)
    dkeys = jax.random.split(dkey, len(names))
    batches = {}
    for nm, k in zip(names, dkeys):
        ids = jax.random.randint(k, (n_sent, SEN_MAXL), 1, VOCAB + 2,
                                 dtype=jnp.int32)
        ids = ids.at[:, -2:].set(0)     # some padding tokens (padding_idx=0)
        batches[nm] = ids

    g_names = ["g_0_g", "g_1_g", "g_2_g", "j_0_g", "j_1_g", "j_2_g"]
    j_names = ["g_0_j", "g_1_j", "g_2_j", "j_0_j", "j_1_j", "j_2_j"]
    ids_g = jnp.concatenate([batches[n] for n in g_names], axis=0)
    ids_j = jnp.concatenate([batches[n] for n in j_names], axis=0)

    # --- encoder sanity check vs float64 numpy (bf16 MXU -> relaxed tol) ----
    sen_g, sen_j = encode_all_sentences(params, ids_g, ids_j)
    for side, sen, name in ((("G_enc",), sen_g, "g_0_g"),
                            (("J_enc",), sen_j, "g_0_j")):
        pe = params[side[0]]
        emb0 = jnp.take(pe["emb"], batches[name], axis=0)
        ref = ref_encode_np(np.asarray(emb0, np.float64),
                            np.asarray(pe["w1"], np.float64),
                            np.asarray(pe["b1"], np.float64),
                            np.asarray(pe["w2"], np.float64),
                            np.asarray(pe["b2"], np.float64))
        np.testing.assert_allclose(np.asarray(sen[:n_sent]), ref,
                                   rtol=3e-2, atol=3e-2)

    # --- classifier sanity check --------------------------------------------
    sg = np.asarray(sen_g[:n_sent])
    sj = np.asarray(sen_j[:n_sent])
    gdoc, jdoc, start = [], [], 0
    for ln in LENGTHS:
        gdoc.append(sg[start:start + ln].mean(0))   # geek_pool -> mean
        jdoc.append(sj[start:start + ln].max(0))    # job_pool  -> max
        start += ln
    gdoc = jnp.asarray(np.stack(gdoc), jnp.float32)
    jdoc = jnp.asarray(np.stack(jdoc), jnp.float32)
    wbil_cat, bbil_cat, wlin_bd, blin_col = stacked_cla_weights(params)
    p_pal = np.asarray(classifiers_pallas(gdoc, jdoc, wbil_cat, bbil_cat,
                                          wlin_bd, blin_col))      # (3, B)
    for ci, ck in enumerate(("G_cla", "J_cla", "M_cla")):
        pc = params[ck]
        p_ref = ref_classifier_np(np.asarray(gdoc, np.float64),
                                  np.asarray(jdoc, np.float64),
                                  np.asarray(pc["wbil"], np.float64),
                                  np.asarray(pc["bbil"], np.float64),
                                  np.asarray(pc["wlin"], np.float64),
                                  np.asarray(pc["blin"], np.float64))
        np.testing.assert_allclose(p_pal[ci], p_ref[:, 0],
                                   rtol=2e-2, atol=2e-2)

    # --- full GJ_net forward (train=True) -----------------------------------
    outs = gj_net_forward(params, batches, LENGTHS, train=True)
    outs = jax.block_until_ready(outs)
    assert all(np.isfinite(float(o)) for o in outs)

    print("KERNEL_OK")
</pallas_src>

<mosaic_0001>
module attributes {stable_mosaic.version = 11 : i64} {
  func.func @encoder_kernel(%arg0: i32, %arg1: i32, %arg2: memref<1x32x12x32xbf16, #tpu.memory_space<vmem>>, %arg3: memref<1x160x32xbf16, #tpu.memory_space<vmem>>, %arg4: memref<1x1x32xf32, #tpu.memory_space<vmem>>, %arg5: memref<1x96x32xbf16, #tpu.memory_space<vmem>>, %arg6: memref<1x1x32xf32, #tpu.memory_space<vmem>>, %arg7: memref<1x32x32xf32, #tpu.memory_space<vmem>>) attributes {dimension_semantics = [#tpu.dimension_semantics<parallel>, #tpu.dimension_semantics<parallel>], iteration_bounds = array<i64: 2, 1>, scalar_prefetch = 0 : i64, scratch_operands = 0 : i64, tpu.core_type = #tpu.core_type<tc>, window_params = [{transform_indices = @transform_0, window_bounds = array<i64: 1, 32, 12, 32>}, {transform_indices = @transform_1, window_bounds = array<i64: 1, 160, 32>}, {transform_indices = @transform_2, window_bounds = array<i64: 1, 1, 32>}, {transform_indices = @transform_3, window_bounds = array<i64: 1, 96, 32>}, {transform_indices = @transform_4, window_bounds = array<i64: 1, 1, 32>}, {transform_indices = @transform_5, window_bounds = array<i64: 1, 32, 32>}]} {
    %c0 = arith.constant 0 : index
    %c0_0 = arith.constant 0 : index
    %c0_1 = arith.constant 0 : index
    %c0_2 = arith.constant 0 : index
    %0 = vector.load %arg2[%c0, %c0_0, %c0_1, %c0_2] : memref<1x32x12x32xbf16, #tpu.memory_space<vmem>>, vector<1x32x12x32xbf16>
    %1 = vector.shape_cast %0 : vector<1x32x12x32xbf16> to vector<32x12x32xbf16>
    %2 = vector.extract_strided_slice %1 {offsets = [0, 0, 0], sizes = [32, 8, 32], strides = [1, 1, 1]} : vector<32x12x32xbf16> to vector<32x8x32xbf16>
    %3 = vector.extract_strided_slice %1 {offsets = [0, 1, 0], sizes = [32, 8, 32], strides = [1, 1, 1]} : vector<32x12x32xbf16> to vector<32x8x32xbf16>
    %4 = vector.extract_strided_slice %1 {offsets = [0, 2, 0], sizes = [32, 8, 32], strides = [1, 1, 1]} : vector<32x12x32xbf16> to vector<32x8x32xbf16>
    %5 = vector.extract_strided_slice %1 {offsets = [0, 3, 0], sizes = [32, 8, 32], strides = [1, 1, 1]} : vector<32x12x32xbf16> to vector<32x8x32xbf16>
    %6 = vector.extract_strided_slice %1 {offsets = [0, 4, 0], sizes = [32, 8, 32], strides = [1, 1, 1]} : vector<32x12x32xbf16> to vector<32x8x32xbf16>
    %7 = tpu.concatenate %2, %3, %4, %5, %6 in 2 : vector<32x8x32xbf16>, vector<32x8x32xbf16>, vector<32x8x32xbf16>, vector<32x8x32xbf16>, vector<32x8x32xbf16> -> vector<32x8x160xbf16>
    %8 = vector.shape_cast %7 : vector<32x8x160xbf16> to vector<256x160xbf16>
    %c0_3 = arith.constant 0 : index
    %c0_4 = arith.constant 0 : index
    %c0_5 = arith.constant 0 : index
    %9 = vector.load %arg3[%c0_3, %c0_4, %c0_5] : memref<1x160x32xbf16, #tpu.memory_space<vmem>>, vector<1x160x32xbf16>
    %10 = vector.shape_cast %9 : vector<1x160x32xbf16> to vector<160x32xbf16>
    %cst = arith.constant dense<0.000000e+00> : vector<256x32xf32>
    %11 = tpu.matmul %8, %10, %cst {dimension_numbers = #tpu.dot_dimension_numbers<[1], [0], [0], [1], [0, 0, 1, 1], [], []>} : vector<256x160xbf16>, vector<160x32xbf16>, vector<256x32xf32> -> vector<256x32xf32>
    %c0_6 = arith.constant 0 : index
    %c0_7 = arith.constant 0 : index
    %c0_8 = arith.constant 0 : index
    %12 = vector.load %arg4[%c0_6, %c0_7, %c0_8] : memref<1x1x32xf32, #tpu.memory_space<vmem>>, vector<1x1x32xf32>
    %13 = vector.shape_cast %12 : vector<1x1x32xf32> to vector<1x32xf32>
    %14 = vector.broadcast %13 : vector<1x32xf32> to vector<256x32xf32>
    %15 = arith.addf %11, %14 : vector<256x32xf32>
    %cst_9 = arith.constant 0.000000e+00 : f32
    %16 = vector.broadcast %cst_9 : f32 to vector<256x32xf32>
    %17 = arith.maximumf %15, %16 : vector<256x32xf32>
    %18 = vector.shape_cast %17 : vector<256x32xf32> to vector<32x8x32xf32>
    %cst_10 = arith.constant 0.000000e+00 : f32
    %19 = vector.broadcast %cst_10 : f32 to vector<32x1x32xf32>
    %20 = tpu.concatenate %19, %18, %19 in 1 : vector<32x1x32xf32>, vector<32x8x32xf32>, vector<32x1x32xf32> -> vector<32x10x32xf32>
    %21 = arith.truncf %20 : vector<32x10x32xf32> to vector<32x10x32xbf16>
    %22 = vector.extract_strided_slice %21 {offsets = [0, 0, 0], sizes = [32, 8, 32], strides = [1, 1, 1]} : vector<32x10x32xbf16> to vector<32x8x32xbf16>
    %23 = vector.extract_strided_slice %21 {offsets = [0, 1, 0], sizes = [32, 8, 32], strides = [1, 1, 1]} : vector<32x10x32xbf16> to vector<32x8x32xbf16>
    %24 = vector.extract_strided_slice %21 {offsets = [0, 2, 0], sizes = [32, 8, 32], strides = [1, 1, 1]} : vector<32x10x32xbf16> to vector<32x8x32xbf16>
    %25 = tpu.concatenate %22, %23, %24 in 2 : vector<32x8x32xbf16>, vector<32x8x32xbf16>, vector<32x8x32xbf16> -> vector<32x8x96xbf16>
    %26 = vector.shape_cast %25 : vector<32x8x96xbf16> to vector<256x96xbf16>
    %c0_11 = arith.constant 0 : index
    %c0_12 = arith.constant 0 : index
    %c0_13 = arith.constant 0 : index
    %27 = vector.load %arg5[%c0_11, %c0_12, %c0_13] : memref<1x96x32xbf16, #tpu.memory_space<vmem>>, vector<1x96x32xbf16>
    %28 = vector.shape_cast %27 : vector<1x96x32xbf16> to vector<96x32xbf16>
    %cst_14 = arith.constant dense<0.000000e+00> : vector<256x32xf32>
    %29 = tpu.matmul %26, %28, %cst_14 {dimension_numbers = #tpu.dot_dimension_numbers<[1], [0], [0], [1], [0, 0, 1, 1], [], []>} : vector<256x96xbf16>, vector<96x32xbf16>, vector<256x32xf32> -> vector<256x32xf32>
    %c0_15 = arith.constant 0 : index
    %c0_16 = arith.constant 0 : index
    %c0_17 = arith.constant 0 : index
    %30 = vector.load %arg6[%c0_15, %c0_16, %c0_17] : memref<1x1x32xf32, #tpu.memory_space<vmem>>, vector<1x1x32xf32>
    %31 = vector.shape_cast %30 : vector<1x1x32xf32> to vector<1x32xf32>
    %32 = vector.broadcast %31 : vector<1x32xf32> to vector<256x32xf32>
    %33 = arith.addf %29, %32 : vector<256x32xf32>
    %cst_18 = arith.constant 0.000000e+00 : f32
    %34 = vector.broadcast %cst_18 : f32 to vector<256x32xf32>
    %35 = arith.maximumf %33, %34 : vector<256x32xf32>
    %36 = vector.shape_cast %35 : vector<256x32xf32> to vector<32x8x32xf32>
    %cst_19 = arith.constant dense<0xFF800000> : vector<32x32xf32>
    %37 = vector.multi_reduction <maximumf>, %36, %cst_19 [1] : vector<32x8x32xf32> to vector<32x32xf32>
    %c0_20 = arith.constant 0 : index
    %c0_21 = arith.constant 0 : index
    %c0_22 = arith.constant 0 : index
    %38 = vector.load %arg7[%c0_20, %c0_21, %c0_22] : memref<1x32x32xf32, #tpu.memory_space<vmem>>, vector<1x32x32xf32>
    %39 = vector.shape_cast %38 : vector<1x32x32xf32> to vector<32x32xf32>
    %40 = vector.shape_cast %37 : vector<32x32xf32> to vector<1x32x32xf32>
    tpu.vector_store %arg7[%c0_20, %c0_21, %c0_22], %40 {strides = array<i32>} : memref<1x32x32xf32, #tpu.memory_space<vmem>>, vector<1x32x32xf32>,
    return
  }
  func.func @transform_0(%arg0: i32, %arg1: i32) -> (i32, i32, i32, i32) {
    %c0_i32 = arith.constant 0 : i32
    %c0_i32_0 = arith.constant 0 : i32
    %c0_i32_1 = arith.constant 0 : i32
    return %arg0, %arg1, %c0_i32, %c0_i32_0 : i32, i32, i32, i32
  }
  func.func @transform_1(%arg0: i32, %arg1: i32) -> (i32, i32, i32) {
    %c0_i32 = arith.constant 0 : i32
    %c0_i32_0 = arith.constant 0 : i32
    %c0_i32_1 = arith.constant 0 : i32
    return %arg0, %c0_i32, %c0_i32_0 : i32, i32, i32
  }
  func.func @transform_2(%arg0: i32, %arg1: i32) -> (i32, i32, i32) {
    %c0_i32 = arith.constant 0 : i32
    %c0_i32_0 = arith.constant 0 : i32
    %c0_i32_1 = arith.constant 0 : i32
    return %arg0, %c0_i32, %c0_i32_0 : i32, i32, i32
  }
  func.func @transform_3(%arg0: i32, %arg1: i32) -> (i32, i32, i32) {
    %c0_i32 = arith.constant 0 : i32
    %c0_i32_0 = arith.constant 0 : i32
    %c0_i32_1 = arith.constant 0 : i32
    return %arg0, %c0_i32, %c0_i32_0 : i32, i32, i32
  }
  func.func @transform_4(%arg0: i32, %arg1: i32) -> (i32, i32, i32) {
    %c0_i32 = arith.constant 0 : i32
    %c0_i32_0 = arith.constant 0 : i32
    %c0_i32_1 = arith.constant 0 : i32
    return %arg0, %c0_i32, %c0_i32_0 : i32, i32, i32
  }
  func.func @transform_5(%arg0: i32, %arg1: i32) -> (i32, i32, i32) {
    %c0_i32 = arith.constant 0 : i32
    %c0_i32_0 = arith.constant 0 : i32
    return %arg0, %arg1, %c0_i32 : i32, i32, i32
  }
}

</mosaic_0001>

<llo_original>
// kernel: tpu_custom_call.1
$region0: #{tpu_custom_call.1}
  #allocation0 [shape = 'u32[]', space=smem, size = 0x4, offset = 0x4, fixed_abs, tag = 'smem constant byte address 0x4 - core index']
  #allocation1 [shape = 'u32[72,128]{1,0:T(1,128)}', space=vmem, size = 0x9000, scoped, tag = 'internal scratch']
  %s0 = inlined_call_operand.vmem [shape: bf16[2,32,12,32], index: 0, kind: input, shape index: {}]
  %s1 = inlined_call_operand.vmem [shape: bf16[2,160,32], index: 1, kind: input, shape index: {}]
  %s2 = inlined_call_operand.vmem [shape: f32[2,1,32], index: 2, kind: input, shape index: {}]
  %s3 = inlined_call_operand.vmem [shape: bf16[2,96,32], index: 3, kind: input, shape index: {}]
  %s4 = inlined_call_operand.vmem [shape: f32[2,1,32], index: 4, kind: input, shape index: {}]
  %s5 = inlined_call_operand.hbm [shape: f32[2,32,32], index: 5, kind: output, shape index: {}]
  %s6 = sld [smem:[#allocation0]]
  $region53: #{tpu_custom_call.1} parent=0
    _
  %s8 = ssub.s32 1, %s6
  %s9 = scalar_select 0, %s8, %s6
  $region1: #{tpu_custom_call.1} parent=0
    #allocation2 [shape = 'u8[32768]{0}', space=vmem, size = 0x8000, scoped, tag = 'output window, operand 0']
    #allocation3 [shape = 's32[2]{0}', space=sflag, size = 0x8, scoped, tag = 'scoped memory for tpu_custom_call.1']
    %10 = vsyncpa [#allocation3], 0
    %s11 = scalar_lea.sflag [#allocation3], 1
    %12 = vsyncpa %s11, 0
    loop: start=0, step=1, limit=4
    $region2: #{tpu_custom_call.1} parent=1 // loop_pre_header
      _
    $region3: #{tpu_custom_call.1} parent=1 // loop_header
      %s14 = sphi 0, %s18
      %p15 = scmp.ge.s32.totalorder %s14, 4
      %s21 = sphi 0, %s33
      %s22 = sphi 0, %s29
      %s23 = sphi 0, %s21
      %s24 = sphi 0, %s22
      %s25 = sphi 0, %s23
      %s26 = sphi 0, %s24
      %s38 = sphi 0, %s40
      %s41 = sphi 0, %s38
      %s42 = sphi 0, %s41
      %s58 = sphi 0, %s42
      %s64 = sphi 0, %s66
      %s67 = sphi 0, %s64
      %s68 = sphi 0, %s67
      %s84 = sphi 0, %s68
      %s90 = sphi 0, %s92
      %s93 = sphi 0, %s90
      %s94 = sphi 0, %s93
      %s110 = sphi 0, %s94
      %s116 = sphi 0, %s118
      %s119 = sphi 0, %s116
      %s120 = sphi 0, %s119
      %s136 = sphi 0, %s120
      %s142 = sphi 0, %s144
      %s145 = sphi 0, %s142
      %s146 = sphi 0, %s145
      %s162 = sphi 0, %s146
      %s170 = sphi 0, %s172
      %s173 = sphi 0, %s170
      %s174 = sphi 0, %s173
      %s190 = sphi 0, %s174
    $region4: #{tpu_custom_call.1} parent=1 // loop_header_branch
      %17 = sbr.rel (%p15) target = $region8
    $region5: #{tpu_custom_call.1} parent=1 // loop_body
      %s19 = ssub.s32 %s14, 1
      %s20 = ssub.s32 %s14, 2
      %s27 = sadd.s32 1, %s22
      %p28 = scmp.ge.s32.totalorder %s27, 1
      %s29 = scalar_select %p28, 0, %s27
      %s30 = sadd.s32 1, %s21
      %s31 = scalar_select %p28, %s30, %s21
      %p32 = scmp.ge.s32.totalorder %s31, 2
      %s33 = scalar_select %p32, 0, %s31
      %s34 = ssub.s32 %s21, %s33
      %s35 = ssub.s32 %s22, %s29
      %s36 = sor.u32 %s34, %s35
      %p37 = scmp.eq.s32.totalorder %s36, 0
      %s39 = sadd.s32 %s38, 1
      %s40 = scalar_select %p37, %s38, %s39
      %p43 = pneg %p37
      %p44 = scmp.eq.s32.totalorder %s14, 1
      %p45 = por %p43, %p44
      %p46 = scmp.ne.s32.totalorder %s38, %s41
      %p47 = scmp.eq.s32.totalorder %s14, 0
      %p48 = por %p46, %p47
      %p49 = scmp.ne.s32.totalorder %s38, %s41
      %p50 = scmp.eq.s32.totalorder %s19, 1
      %p51 = por %p49, %p50
      %p52 = scmp.ne.s32.totalorder %s41, %s42
      %p53 = scmp.eq.s32.totalorder %s19, 0
      %p54 = por %p52, %p53
      %p55 = scmp.ne.s32.totalorder %s41, %s42
      %p56 = scmp.eq.s32.totalorder %s20, 1
      %p57 = por %p55, %p56
      %p59 = scmp.ne.s32.totalorder %s42, %s58
      %p60 = scmp.eq.s32.totalorder %s20, 0
      %p61 = por %p59, %p60
      %s62 = ssub.s32 %s21, %s33
      %p63 = scmp.eq.s32.totalorder %s62, 0
      %s65 = sadd.s32 %s64, 1
      %s66 = scalar_select %p63, %s64, %s65
      %p69 = pneg %p63
      %p70 = scmp.eq.s32.totalorder %s14, 1
      %p71 = por %p69, %p70
      %p72 = scmp.ne.s32.totalorder %s64, %s67
      %p73 = scmp.eq.s32.totalorder %s14, 0
      %p74 = por %p72, %p73
      %p75 = scmp.ne.s32.totalorder %s64, %s67
      %p76 = scmp.eq.s32.totalorder %s19, 1
      %p77 = por %p75, %p76
      %p78 = scmp.ne.s32.totalorder %s67, %s68
      %p79 = scmp.eq.s32.totalorder %s19, 0
      %p80 = por %p78, %p79
      %p81 = scmp.ne.s32.totalorder %s67, %s68
      %p82 = scmp.eq.s32.totalorder %s20, 1
      %p83 = por %p81, %p82
      %p85 = scmp.ne.s32.totalorder %s68, %s84
      %p86 = scmp.eq.s32.totalorder %s20, 0
      %p87 = por %p85, %p86
      %s88 = ssub.s32 %s21, %s33
      %p89 = scmp.eq.s32.totalorder %s88, 0
      %s91 = sadd.s32 %s90, 1
      %s92 = scalar_select %p89, %s90, %s91
      %p95 = pneg %p89
      %p96 = scmp.eq.s32.totalorder %s14, 1
      %p97 = por %p95, %p96
      %p98 = scmp.ne.s32.totalorder %s90, %s93
      %p99 = scmp.eq.s32.totalorder %s14, 0
      %p100 = por %p98, %p99
      %p101 = scmp.ne.s32.totalorder %s90, %s93
      %p102 = scmp.eq.s32.totalorder %s19, 1
      %p103 = por %p101, %p102
      %p104 = scmp.ne.s32.totalorder %s93, %s94
      %p105 = scmp.eq.s32.totalorder %s19, 0
      %p106 = por %p104, %p105
      %p107 = scmp.ne.s32.totalorder %s93, %s94
      %p108 = scmp.eq.s32.totalorder %s20, 1
      %p109 = por %p107, %p108
      %p111 = scmp.ne.s32.totalorder %s94, %s110
      %p112 = scmp.eq.s32.totalorder %s20, 0
      %p113 = por %p111, %p112
      %s114 = ssub.s32 %s21, %s33
      %p115 = scmp.eq.s32.totalorder %s114, 0
      %s117 = sadd.s32 %s116, 1
      %s118 = scalar_select %p115, %s116, %s117
      %p121 = pneg %p115
      %p122 = scmp.eq.s32.totalorder %s14, 1
      %p123 = por %p121, %p122
      %p124 = scmp.ne.s32.totalorder %s116, %s119
      %p125 = scmp.eq.s32.totalorder %s14, 0
      %p126 = por %p124, %p125
      %p127 = scmp.ne.s32.totalorder %s116, %s119
      %p128 = scmp.eq.s32.totalorder %s19, 1
      %p129 = por %p127, %p128
      %p130 = scmp.ne.s32.totalorder %s119, %s120
      %p131 = scmp.eq.s32.totalorder %s19, 0
      %p132 = por %p130, %p131
      %p133 = scmp.ne.s32.totalorder %s119, %s120
      %p134 = scmp.eq.s32.totalorder %s20, 1
      %p135 = por %p133, %p134
      %p137 = scmp.ne.s32.totalorder %s120, %s136
      %p138 = scmp.eq.s32.totalorder %s20, 0
      %p139 = por %p137, %p138
      %s140 = ssub.s32 %s21, %s33
      %p141 = scmp.eq.s32.totalorder %s140, 0
      %s143 = sadd.s32 %s142, 1
      %s144 = scalar_select %p141, %s142, %s143
      %p147 = pneg %p141
      %p148 = scmp.eq.s32.totalorder %s14, 1
      %p149 = por %p147, %p148
      %p150 = scmp.ne.s32.totalorder %s142, %s145
      %p151 = scmp.eq.s32.totalorder %s14, 0
      %p152 = por %p150, %p151
      %p153 = scmp.ne.s32.totalorder %s142, %s145
      %p154 = scmp.eq.s32.totalorder %s19, 1
      %p155 = por %p153, %p154
      %p156 = scmp.ne.s32.totalorder %s145, %s146
      %p157 = scmp.eq.s32.totalorder %s19, 0
      %p158 = por %p156, %p157
      %p159 = scmp.ne.s32.totalorder %s145, %s146
      %p160 = scmp.eq.s32.totalorder %s20, 1
      %p161 = por %p159, %p160
      %p163 = scmp.ne.s32.totalorder %s146, %s162
      %p164 = scmp.eq.s32.totalorder %s20, 0
      %p165 = por %p163, %p164
      %s166 = ssub.s32 %s21, %s33
      %s167 = ssub.s32 %s22, %s29
      %s168 = sor.u32 %s166, %s167
      %p169 = scmp.eq.s32.totalorder %s168, 0
      %s171 = sadd.s32 %s170, 1
      %s172 = scalar_select %p169, %s170, %s171
      %p175 = pneg %p169
      %p176 = scmp.eq.s32.totalorder %s14, 1
      %p177 = por %p175, %p176
      %p178 = scmp.ne.s32.totalorder %s170, %s173
      %p179 = scmp.eq.s32.totalorder %s14, 0
      %p180 = por %p178, %p179
      %p181 = scmp.ne.s32.totalorder %s170, %s173
      %p182 = scmp.eq.s32.totalorder %s19, 1
      %p183 = por %p181, %p182
      %p184 = scmp.ne.s32.totalorder %s173, %s174
      %p185 = scmp.eq.s32.totalorder %s19, 0
      %p186 = por %p184, %p185
      %p187 = scmp.ne.s32.totalorder %s173, %s174
      %p188 = scmp.eq.s32.totalorder %s20, 1
      %p189 = por %p187, %p188
      %p191 = scmp.ne.s32.totalorder %s174, %s190
      %p192 = scmp.eq.s32.totalorder %s20, 0
      %p193 = por %p191, %p192
      %p194 = scmp.le.s32.totalorder 1, %s14
      %p195 = scmp.lt.s32.totalorder %s14, 3
      %p196 = pnand %p194, %p195
      %p197 = pneg %p196
      // Predicated region
      $region9: #{tpu_custom_call.1} parent=5 // pred_check
        _
      $region10: #{tpu_custom_call.1} parent=5 // pred_check_branch
        %199 = sbr.rel (%p196) target = $region12
      $region11: #{tpu_custom_call.1} parent=5 // pred_region
        %s200 = ssub.s32 %s14, 1
      $region12: #{tpu_custom_call.1} parent=5 // pred_fallthru
        _
      %p201 = scmp.lt.s32.totalorder %s14, 2
      // Predicated region
      $region13: #{tpu_custom_call.1} parent=5 // pred_check
        %p202 = pneg %p201
      $region14: #{tpu_custom_call.1} parent=5 // pred_check_branch
        %204 = sbr.rel (%p202) target = $region16
      $region15: #{tpu_custom_call.1} parent=5 // pred_region
        // Predicated region
        $region17: #{tpu_custom_call.1} parent=15 // pred_check
          %p205 = pneg %p48
        $region18: #{tpu_custom_call.1} parent=15 // pred_check_branch
          %207 = sbr.rel (%p205) target = $region20
        $region19: #{tpu_custom_call.1} parent=15 // pred_region
          %s208 = smul.u32 32, %s22
          %p209 = scmp.lt.s32.totalorder %s21, 1
          %s210 = scalar_select %p209, %s21, 1
          %p211 = scmp.lt.s32.totalorder %s208, 31
          %s212 = scalar_select %p211, %s208, 31
          %s213 = smul.addr %s212, 2
          %s214 = smul.addr %s210, 64
          %s215 = sadd.s32 %s213, %s214
          %s216 = smul.addr %s215, 4
          %s217 = scalar_lea.vmem %s0, %s216
          %s218 = smul.u32 32, %s22
        $region20: #{tpu_custom_call.1} parent=15 // pred_fallthru
          _
        // Predicated region
        $region21: #{tpu_custom_call.1} parent=15 // pred_check
          %p219 = pneg %p74
        $region22: #{tpu_custom_call.1} parent=15 // pred_check_branch
          %221 = sbr.rel (%p219) target = $region24
        $region23: #{tpu_custom_call.1} parent=15 // pred_region
          %p222 = scmp.lt.s32.totalorder %s21, 1
          %s223 = scalar_select %p222, %s21, 1
          %s224 = smul.addr %s223, 20
          %s225 = smul.addr %s224, 4
          %s226 = scalar_lea.vmem %s1, %s225
        $region24: #{tpu_custom_call.1} parent=15 // pred_fallthru
          _
        // Predicated region
        $region25: #{tpu_custom_call.1} parent=15 // pred_check
          %p227 = pneg %p100
        $region26: #{tpu_custom_call.1} parent=15 // pred_check_branch
          %229 = sbr.rel (%p227) target = $region28
        $region27: #{tpu_custom_call.1} parent=15 // pred_region
          %p230 = scmp.lt.s32.totalorder %s21, 1
          %s231 = scalar_select %p230, %s21, 1
          %s232 = scalar_lea.vmem %s2, %s231
        $region28: #{tpu_custom_call.1} parent=15 // pred_fallthru
          _
        // Predicated region
        $region29: #{tpu_custom_call.1} parent=15 // pred_check
          %p233 = pneg %p126
        $region30: #{tpu_custom_call.1} parent=15 // pred_check_branch
          %235 = sbr.rel (%p233) target = $region32
        $region31: #{tpu_custom_call.1} parent=15 // pred_region
          %p236 = scmp.lt.s32.totalorder %s21, 1
          %s237 = scalar_select %p236, %s21, 1
          %s238 = smul.addr %s237, 12
          %s239 = smul.addr %s238, 4
          %s240 = scalar_lea.vmem %s3, %s239
        $region32: #{tpu_custom_call.1} parent=15 // pred_fallthru
          _
        // Predicated region
        $region33: #{tpu_custom_call.1} parent=15 // pred_check
          %p241 = pneg %p152
        $region34: #{tpu_custom_call.1} parent=15 // pred_check_branch
          %243 = sbr.rel (%p241) target = $region36
        $region35: #{tpu_custom_call.1} parent=15 // pred_region
          %p244 = scmp.lt.s32.totalorder %s21, 1
          %s245 = scalar_select %p244, %s21, 1
          %s246 = scalar_lea.vmem %s4, %s245
        $region36: #{tpu_custom_call.1} parent=15 // pred_fallthru
          _
      $region16: #{tpu_custom_call.1} parent=5 // pred_fallthru
        _
      %p247 = scmp.le.s32.totalorder 1, %s14
      %p248 = scmp.lt.s32.totalorder %s14, 3
      %p249 = pnand %p247, %p248
      %p250 = pneg %p249
      // Predicated region
      $region37: #{tpu_custom_call.1} parent=5 // pred_check
        _
      $region38: #{tpu_custom_call.1} parent=5 // pred_check_branch
        %252 = sbr.rel (%p249) target = $region40
      $region39: #{tpu_custom_call.1} parent=5 // pred_region
        %s253 = ssub.s32 %s14, 1
        %s254 = smul.u32 32, %s24
        %p255 = scmp.lt.s32.totalorder %s23, 1
        %s256 = scalar_select %p255, %s23, 1
        %p257 = scmp.lt.s32.totalorder %s254, 31
        %s258 = scalar_select %p257, %s254, 31
        %s259 = smul.addr %s258, 2
        %s260 = smul.addr %s256, 64
        %s261 = sadd.s32 %s259, %s260
        %s262 = smul.addr %s261, 4
        %s263 = scalar_lea.vmem %s0, %s262
        %p264 = pneg %p54
        %p265 = pneg %p51
        %p266 = scmp.lt.s32.totalorder %s23, 1
        %s267 = scalar_select %p266, %s23, 1
        %s268 = smul.addr %s267, 20
        %s269 = smul.addr %s268, 4
        %s270 = scalar_lea.vmem %s1, %s269
        %p271 = pneg %p80
        %p272 = pneg %p77
        %p273 = scmp.lt.s32.totalorder %s23, 1
        %s274 = scalar_select %p273, %s23, 1
        %s275 = scalar_lea.vmem %s2, %s274
        %p276 = pneg %p106
        %p277 = pneg %p103
        %p278 = scmp.lt.s32.totalorder %s23, 1
        %s279 = scalar_select %p278, %s23, 1
        %s280 = smul.addr %s279, 12
        %s281 = smul.addr %s280, 4
        %s282 = scalar_lea.vmem %s3, %s281
        %p283 = pneg %p132
        %p284 = pneg %p129
        %p285 = scmp.lt.s32.totalorder %s23, 1
        %s286 = scalar_select %p285, %s23, 1
        %s287 = scalar_lea.vmem %s4, %s286
        %p288 = pneg %p158
        %p289 = pneg %p155
        %p290 = pneg %p186
        %p291 = pneg %p183
        %s292 = sand.u32 %s173, 1
        %s293 = scalar_lea.sflag [#allocation3], %s292
        %s294 = sand.u32 %s173, 1
        %s295 = smul.addr %s294, 32
        %s296 = scalar_lea.vmem [#allocation2], %s295
        %s297 = smul.u32 32, %s24
        %p298 = scmp.lt.s32.totalorder %s23, 1
        %s299 = scalar_select %p298, %s23, 1
        %p300 = scmp.lt.s32.totalorder %s297, 31
        %s301 = scalar_select %p300, %s297, 31
        %s302 = smul.addr %s301, 2
        %s303 = smul.addr %s299, 64
        %s304 = sadd.s32 %s302, %s303
        %s305 = smul.addr %s304, 4
        %s306 = scalar_lea.vmem %s0, %s305
        %s307 = smul.u32 32, %s24
        %p308 = scmp.lt.s32.totalorder %s23, 1
        %s309 = scalar_select %p308, %s23, 1
        %s310 = smul.addr %s309, 20
        %s311 = smul.addr %s310, 4
        %s312 = scalar_lea.vmem %s1, %s311
        %p313 = scmp.lt.s32.totalorder %s23, 1
        %s314 = scalar_select %p313, %s23, 1
        %s315 = scalar_lea.vmem %s2, %s314
        %p316 = scmp.lt.s32.totalorder %s23, 1
        %s317 = scalar_select %p316, %s23, 1
        %s318 = smul.addr %s317, 12
        %s319 = smul.addr %s318, 4
        %s320 = scalar_lea.vmem %s3, %s319
        %p321 = scmp.lt.s32.totalorder %s23, 1
        %s322 = scalar_select %p321, %s23, 1
        %s323 = scalar_lea.vmem %s4, %s322
        %s324 = smul.u32 4, %s24
        %v326 = vld [vmem:[%s306] sm:$0xf]
        %v327 = vld [vmem:[%s306 + $0x4] sm:$0x3]
        %v328 = vld [vmem:[%s306 + $0x8] sm:$0xf]
        %v329 = vld [vmem:[%s306 + $0xc] sm:$0x3]
        %v330 = vld [vmem:[%s306 + $0x10] sm:$0xf]
        %v331 = vld [vmem:[%s306 + $0x14] sm:$0x3]
        %v332 = vld [vmem:[%s306 + $0x18] sm:$0xf]
        %v333 = vld [vmem:[%s306 + $0x1c] sm:$0x3]
        %v334 = vld [vmem:[%s306 + $0x20] sm:$0xf]
        %v335 = vld [vmem:[%s306 + $0x24] sm:$0x3]
        %v336 = vld [vmem:[%s306 + $0x28] sm:$0xf]
        %v337 = vld [vmem:[%s306 + $0x2c] sm:$0x3]
        %v338 = vld [vmem:[%s306 + $0x30] sm:$0xf]
        %v339 = vld [vmem:[%s306 + $0x34] sm:$0x3]
        %v340 = vld [vmem:[%s306 + $0x38] sm:$0xf]
        %v341 = vld [vmem:[%s306 + $0x3c] sm:$0x3]
        %v342 = vld [vmem:[%s306 + $0x40] sm:$0xf]
        %v343 = vld [vmem:[%s306 + $0x44] sm:$0x3]
        %v344 = vld [vmem:[%s306 + $0x48] sm:$0xf]
        %v345 = vld [vmem:[%s306 + $0x4c] sm:$0x3]
        %v346 = vld [vmem:[%s306 + $0x50] sm:$0xf]
        %v347 = vld [vmem:[%s306 + $0x54] sm:$0x3]
        %v348 = vld [vmem:[%s306 + $0x58] sm:$0xf]
        %v349 = vld [vmem:[%s306 + $0x5c] sm:$0x3]
        %v350 = vld [vmem:[%s306 + $0x60] sm:$0xf]
        %v351 = vld [vmem:[%s306 + $0x64] sm:$0x3]
        %v352 = vld [vmem:[%s306 + $0x68] sm:$0xf]
        %v353 = vld [vmem:[%s306 + $0x6c] sm:$0x3]
        %v354 = vld [vmem:[%s306 + $0x70] sm:$0xf]
        %v355 = vld [vmem:[%s306 + $0x74] sm:$0x3]
        %v356 = vld [vmem:[%s306 + $0x78] sm:$0xf]
        %v357 = vld [vmem:[%s306 + $0x7c] sm:$0x3]
        %v358 = vld [vmem:[%s306 + $0x80] sm:$0xf]
        %v359 = vld [vmem:[%s306 + $0x84] sm:$0x3]
        %v360 = vld [vmem:[%s306 + $0x88] sm:$0xf]
        %v361 = vld [vmem:[%s306 + $0x8c] sm:$0x3]
        %v362 = vld [vmem:[%s306 + $0x90] sm:$0xf]
        %v363 = vld [vmem:[%s306 + $0x94] sm:$0x3]
        %v364 = vld [vmem:[%s306 + $0x98] sm:$0xf]
        %v365 = vld [vmem:[%s306 + $0x9c] sm:$0x3]
        %v366 = vld [vmem:[%s306 + $0xa0] sm:$0xf]
        %v367 = vld [vmem:[%s306 + $0xa4] sm:$0x3]
        %v368 = vld [vmem:[%s306 + $0xa8] sm:$0xf]
        %v369 = vld [vmem:[%s306 + $0xac] sm:$0x3]
        %v370 = vld [vmem:[%s306 + $0xb0] sm:$0xf]
        %v371 = vld [vmem:[%s306 + $0xb4] sm:$0x3]
        %v372 = vld [vmem:[%s306 + $0xb8] sm:$0xf]
        %v373 = vld [vmem:[%s306 + $0xbc] sm:$0x3]
        %v374 = vld [vmem:[%s306 + $0xc0] sm:$0xf]
        %v375 = vld [vmem:[%s306 + $0xc4] sm:$0x3]
        %v376 = vld [vmem:[%s306 + $0xc8] sm:$0xf]
        %v377 = vld [vmem:[%s306 + $0xcc] sm:$0x3]
        %v378 = vld [vmem:[%s306 + $0xd0] sm:$0xf]
        %v379 = vld [vmem:[%s306 + $0xd4] sm:$0x3]
        %v380 = vld [vmem:[%s306 + $0xd8] sm:$0xf]
        %v381 = vld [vmem:[%s306 + $0xdc] sm:$0x3]
        %v382 = vld [vmem:[%s306 + $0xe0] sm:$0xf]
        %v383 = vld [vmem:[%s306 + $0xe4] sm:$0x3]
        %v384 = vld [vmem:[%s306 + $0xe8] sm:$0xf]
        %v385 = vld [vmem:[%s306 + $0xec] sm:$0x3]
        %v386 = vld [vmem:[%s306 + $0xf0] sm:$0xf]
        %v387 = vld [vmem:[%s306 + $0xf4] sm:$0x3]
        %v388 = vld [vmem:[%s306 + $0xf8] sm:$0xf]
        %v389 = vld [vmem:[%s306 + $0xfc] sm:$0x3]
        %v454 = vunpack.c.l.b16 %v326
        %v455 = vunpack.c.l.b16 %v327
        %v456 = vunpack.c.l.b16 %v328
        %v457 = vunpack.c.l.b16 %v329
        %v458 = vunpack.c.l.b16 %v330
        %v459 = vunpack.c.l.b16 %v331
        %v460 = vunpack.c.l.b16 %v332
        %v461 = vunpack.c.l.b16 %v333
        %v462 = vunpack.c.l.b16 %v334
        %v463 = vunpack.c.l.b16 %v335
        %v464 = vunpack.c.l.b16 %v336
        %v465 = vunpack.c.l.b16 %v337
        %v466 = vunpack.c.l.b16 %v338
        %v467 = vunpack.c.l.b16 %v339
        %v468 = vunpack.c.l.b16 %v340
        %v469 = vunpack.c.l.b16 %v341
        %v470 = vunpack.c.l.b16 %v342
        %v471 = vunpack.c.l.b16 %v343
        %v472 = vunpack.c.l.b16 %v344
        %v473 = vunpack.c.l.b16 %v345
        %v474 = vunpack.c.l.b16 %v346
        %v475 = vunpack.c.l.b16 %v347
        %v476 = vunpack.c.l.b16 %v348
        %v477 = vunpack.c.l.b16 %v349
        %v478 = vunpack.c.l.b16 %v350
        %v479 = vunpack.c.l.b16 %v351
        %v480 = vunpack.c.l.b16 %v352
        %v481 = vunpack.c.l.b16 %v353
        %v482 = vunpack.c.l.b16 %v354
        %v483 = vunpack.c.l.b16 %v355
        %v484 = vunpack.c.l.b16 %v356
        %v485 = vunpack.c.l.b16 %v357
        %v486 = vunpack.c.l.b16 %v358
        %v487 = vunpack.c.l.b16 %v359
        %v488 = vunpack.c.l.b16 %v360
        %v489 = vunpack.c.l.b16 %v361
        %v490 = vunpack.c.l.b16 %v362
        %v491 = vunpack.c.l.b16 %v363
        %v492 = vunpack.c.l.b16 %v364
        %v493 = vunpack.c.l.b16 %v365
        %v494 = vunpack.c.l.b16 %v366
        %v495 = vunpack.c.l.b16 %v367
        %v496 = vunpack.c.l.b16 %v368
        %v497 = vunpack.c.l.b16 %v369
        %v498 = vunpack.c.l.b16 %v370
        %v499 = vunpack.c.l.b16 %v371
        %v500 = vunpack.c.l.b16 %v372
        %v501 = vunpack.c.l.b16 %v373
        %v502 = vunpack.c.l.b16 %v374
        %v503 = vunpack.c.l.b16 %v375
        %v504 = vunpack.c.l.b16 %v376
        %v505 = vunpack.c.l.b16 %v377
        %v506 = vunpack.c.l.b16 %v378
        %v507 = vunpack.c.l.b16 %v379
        %v508 = vunpack.c.l.b16 %v380
        %v509 = vunpack.c.l.b16 %v381
        %v510 = vunpack.c.l.b16 %v382
        %v511 = vunpack.c.l.b16 %v383
        %v512 = vunpack.c.l.b16 %v384
        %v513 = vunpack.c.l.b16 %v385
        %v514 = vunpack.c.l.b16 %v386
        %v515 = vunpack.c.l.b16 %v387
        %v516 = vunpack.c.l.b16 %v388
        %v517 = vunpack.c.l.b16 %v389
        %v518 = vpack.c.b16 %v455, %v454
        %v519 = vpack.c.b16 %v457, %v456
        %v520 = vpack.c.b16 %v459, %v458
        %v521 = vpack.c.b16 %v461, %v460
        %v522 = vpack.c.b16 %v463, %v462
        %v523 = vpack.c.b16 %v465, %v464
        %v524 = vpack.c.b16 %v467, %v466
        %v525 = vpack.c.b16 %v469, %v468
        %v526 = vpack.c.b16 %v471, %v470
        %v527 = vpack.c.b16 %v473, %v472
        %v528 = vpack.c.b16 %v475, %v474
        %v529 = vpack.c.b16 %v477, %v476
        %v530 = vpack.c.b16 %v479, %v478
        %v531 = vpack.c.b16 %v481, %v480
        %v532 = vpack.c.b16 %v483, %v482
        %v533 = vpack.c.b16 %v485, %v484
        %v534 = vpack.c.b16 %v487, %v486
        %v535 = vpack.c.b16 %v489, %v488
        %v536 = vpack.c.b16 %v491, %v490
        %v537 = vpack.c.b16 %v493, %v492
        %v538 = vpack.c.b16 %v495, %v494
        %v539 = vpack.c.b16 %v497, %v496
        %v540 = vpack.c.b16 %v499, %v498
        %v541 = vpack.c.b16 %v501, %v500
        %v542 = vpack.c.b16 %v503, %v502
        %v543 = vpack.c.b16 %v505, %v504
        %v544 = vpack.c.b16 %v507, %v506
        %v545 = vpack.c.b16 %v509, %v508
        %v546 = vpack.c.b16 %v511, %v510
        %v547 = vpack.c.b16 %v513, %v512
        %v548 = vpack.c.b16 %v515, %v514
        %v549 = vpack.c.b16 %v517, %v516
        %v551 = vshrl.u32 %v518, 16
        %v553 = vshll.u32 %v518, 16
        %v555 = vrot.slane %v553, 1
        %v556 = vor.u32 %v551, %v555
        %v558 = vshrl.u32 %v519, 16
        %v560 = vshll.u32 %v519, 16
        %v562 = vrot.slane %v560, 1
        %v563 = vor.u32 %v558, %v562
        %v565 = vshrl.u32 %v520, 16
        %v567 = vshll.u32 %v520, 16
        %v569 = vrot.slane %v567, 1
        %v570 = vor.u32 %v565, %v569
        %v572 = vshrl.u32 %v521, 16
        %v574 = vshll.u32 %v521, 16
        %v576 = vrot.slane %v574, 1
        %v577 = vor.u32 %v572, %v576
        %v579 = vshrl.u32 %v522, 16
        %v581 = vshll.u32 %v522, 16
        %v583 = vrot.slane %v581, 1
        %v584 = vor.u32 %v579, %v583
        %v586 = vshrl.u32 %v523, 16
        %v588 = vshll.u32 %v523, 16
        %v590 = vrot.slane %v588, 1
        %v591 = vor.u32 %v586, %v590
        %v593 = vshrl.u32 %v524, 16
        %v595 = vshll.u32 %v524, 16
        %v597 = vrot.slane %v595, 1
        %v598 = vor.u32 %v593, %v597
        %v600 = vshrl.u32 %v525, 16
        %v602 = vshll.u32 %v525, 16
        %v604 = vrot.slane %v602, 1
        %v605 = vor.u32 %v600, %v604
        %v607 = vshrl.u32 %v526, 16
        %v609 = vshll.u32 %v526, 16
        %v611 = vrot.slane %v609, 1
        %v612 = vor.u32 %v607, %v611
        %v614 = vshrl.u32 %v527, 16
        %v616 = vshll.u32 %v527, 16
        %v618 = vrot.slane %v616, 1
        %v619 = vor.u32 %v614, %v618
        %v621 = vshrl.u32 %v528, 16
        %v623 = vshll.u32 %v528, 16
        %v625 = vrot.slane %v623, 1
        %v626 = vor.u32 %v621, %v625
        %v628 = vshrl.u32 %v529, 16
        %v630 = vshll.u32 %v529, 16
        %v632 = vrot.slane %v630, 1
        %v633 = vor.u32 %v628, %v632
        %v635 = vshrl.u32 %v530, 16
        %v637 = vshll.u32 %v530, 16
        %v639 = vrot.slane %v637, 1
        %v640 = vor.u32 %v635, %v639
        %v642 = vshrl.u32 %v531, 16
        %v644 = vshll.u32 %v531, 16
        %v646 = vrot.slane %v644, 1
        %v647 = vor.u32 %v642, %v646
        %v649 = vshrl.u32 %v532, 16
        %v651 = vshll.u32 %v532, 16
        %v653 = vrot.slane %v651, 1
        %v654 = vor.u32 %v649, %v653
        %v656 = vshrl.u32 %v533, 16
        %v658 = vshll.u32 %v533, 16
        %v660 = vrot.slane %v658, 1
        %v661 = vor.u32 %v656, %v660
        %v663 = vshrl.u32 %v534, 16
        %v665 = vshll.u32 %v534, 16
        %v667 = vrot.slane %v665, 1
        %v668 = vor.u32 %v663, %v667
        %v670 = vshrl.u32 %v535, 16
        %v672 = vshll.u32 %v535, 16
        %v674 = vrot.slane %v672, 1
        %v675 = vor.u32 %v670, %v674
        %v677 = vshrl.u32 %v536, 16
        %v679 = vshll.u32 %v536, 16
        %v681 = vrot.slane %v679, 1
        %v682 = vor.u32 %v677, %v681
        %v684 = vshrl.u32 %v537, 16
        %v686 = vshll.u32 %v537, 16
        %v688 = vrot.slane %v686, 1
        %v689 = vor.u32 %v684, %v688
        %v691 = vshrl.u32 %v538, 16
        %v693 = vshll.u32 %v538, 16
        %v695 = vrot.slane %v693, 1
        %v696 = vor.u32 %v691, %v695
        %v698 = vshrl.u32 %v539, 16
        %v700 = vshll.u32 %v539, 16
        %v702 = vrot.slane %v700, 1
        %v703 = vor.u32 %v698, %v702
        %v705 = vshrl.u32 %v540, 16
        %v707 = vshll.u32 %v540, 16
        %v709 = vrot.slane %v707, 1
        %v710 = vor.u32 %v705, %v709
        %v712 = vshrl.u32 %v541, 16
        %v714 = vshll.u32 %v541, 16
        %v716 = vrot.slane %v714, 1
        %v717 = vor.u32 %v712, %v716
        %v719 = vshrl.u32 %v542, 16
        %v721 = vshll.u32 %v542, 16
        %v723 = vrot.slane %v721, 1
        %v724 = vor.u32 %v719, %v723
        %v726 = vshrl.u32 %v543, 16
        %v728 = vshll.u32 %v543, 16
        %v730 = vrot.slane %v728, 1
        %v731 = vor.u32 %v726, %v730
        %v733 = vshrl.u32 %v544, 16
        %v735 = vshll.u32 %v544, 16
        %v737 = vrot.slane %v735, 1
        %v738 = vor.u32 %v733, %v737
        %v740 = vshrl.u32 %v545, 16
        %v742 = vshll.u32 %v545, 16
        %v744 = vrot.slane %v742, 1
        %v745 = vor.u32 %v740, %v744
        %v747 = vshrl.u32 %v546, 16
        %v749 = vshll.u32 %v546, 16
        %v751 = vrot.slane %v749, 1
        %v752 = vor.u32 %v747, %v751
        %v754 = vshrl.u32 %v547, 16
        %v756 = vshll.u32 %v547, 16
        %v758 = vrot.slane %v756, 1
        %v759 = vor.u32 %v754, %v758
        %v761 = vshrl.u32 %v548, 16
        %v763 = vshll.u32 %v548, 16
        %v765 = vrot.slane %v763, 1
        %v766 = vor.u32 %v761, %v765
        %v768 = vshrl.u32 %v549, 16
        %v770 = vshll.u32 %v549, 16
        %v772 = vrot.slane %v770, 1
        %v773 = vor.u32 %v768, %v772
        %774 = vrot.lane.b32.xlu0 %v556, 32
        %v775 = vpop.permute.xlu0 %774
        %776 = vrot.lane.b32.xlu0 %v563, 32
        %v777 = vpop.permute.xlu0 %776
        %778 = vrot.lane.b32.xlu0 %v570, 32
        %v779 = vpop.permute.xlu0 %778
        %780 = vrot.lane.b32.xlu0 %v577, 32
        %v781 = vpop.permute.xlu0 %780
        %782 = vrot.lane.b32.xlu0 %v584, 32
        %v783 = vpop.permute.xlu0 %782
        %784 = vrot.lane.b32.xlu0 %v591, 32
        %v785 = vpop.permute.xlu0 %784
        %786 = vrot.lane.b32.xlu0 %v598, 32
        %v787 = vpop.permute.xlu0 %786
        %788 = vrot.lane.b32.xlu0 %v605, 32
        %v789 = vpop.permute.xlu0 %788
        %790 = vrot.lane.b32.xlu0 %v612, 32
        %v791 = vpop.permute.xlu0 %790
        %792 = vrot.lane.b32.xlu0 %v619, 32
        %v793 = vpop.permute.xlu0 %792
        %794 = vrot.lane.b32.xlu0 %v626, 32
        %v795 = vpop.permute.xlu0 %794
        %796 = vrot.lane.b32.xlu0 %v633, 32
        %v797 = vpop.permute.xlu0 %796
        %798 = vrot.lane.b32.xlu0 %v640, 32
        %v799 = vpop.permute.xlu0 %798
        %800 = vrot.lane.b32.xlu0 %v647, 32
        %v801 = vpop.permute.xlu0 %800
        %802 = vrot.lane.b32.xlu0 %v654, 32
        %v803 = vpop.permute.xlu0 %802
        %804 = vrot.lane.b32.xlu0 %v661, 32
        %v805 = vpop.permute.xlu0 %804
        %806 = vrot.lane.b32.xlu0 %v668, 32
        %v807 = vpop.permute.xlu0 %806
        %808 = vrot.lane.b32.xlu0 %v675, 32
        %v809 = vpop.permute.xlu0 %808
        %810 = vrot.lane.b32.xlu0 %v682, 32
        %v811 = vpop.permute.xlu0 %810
        %812 = vrot.lane.b32.xlu0 %v689, 32
        %v813 = vpop.permute.xlu0 %812
        %814 = vrot.lane.b32.xlu0 %v696, 32
        %v815 = vpop.permute.xlu0 %814
        %816 = vrot.lane.b32.xlu0 %v703, 32
        %v817 = vpop.permute.xlu0 %816
        %818 = vrot.lane.b32.xlu0 %v710, 32
        %v819 = vpop.permute.xlu0 %818
        %820 = vrot.lane.b32.xlu0 %v717, 32
        %v821 = vpop.permute.xlu0 %820
        %822 = vrot.lane.b32.xlu0 %v724, 32
        %v823 = vpop.permute.xlu0 %822
        %824 = vrot.lane.b32.xlu0 %v731, 32
        %v825 = vpop.permute.xlu0 %824
        %826 = vrot.lane.b32.xlu0 %v738, 32
        %v827 = vpop.permute.xlu0 %826
        %828 = vrot.lane.b32.xlu0 %v745, 32
        %v829 = vpop.permute.xlu0 %828
        %830 = vrot.lane.b32.xlu0 %v752, 32
        %v831 = vpop.permute.xlu0 %830
        %832 = vrot.lane.b32.xlu0 %v759, 32
        %v833 = vpop.permute.xlu0 %832
        %834 = vrot.lane.b32.xlu0 %v766, 32
        %v835 = vpop.permute.xlu0 %834
        %836 = vrot.lane.b32.xlu0 %v773, 32
        %v837 = vpop.permute.xlu0 %836
        %v838 = vrot.slane %v518, 1
        %v839 = vrot.slane %v519, 1
        %v840 = vrot.slane %v520, 1
        %v841 = vrot.slane %v521, 1
        %v842 = vrot.slane %v522, 1
        %v843 = vrot.slane %v523, 1
        %v844 = vrot.slane %v524, 1
        %v845 = vrot.slane %v525, 1
        %v846 = vrot.slane %v526, 1
        %v847 = vrot.slane %v527, 1
        %v848 = vrot.slane %v528, 1
        %v849 = vrot.slane %v529, 1
        %v850 = vrot.slane %v530, 1
        %v851 = vrot.slane %v531, 1
        %v852 = vrot.slane %v532, 1
        %v853 = vrot.slane %v533, 1
        %v854 = vrot.slane %v534, 1
        %v855 = vrot.slane %v535, 1
        %v856 = vrot.slane %v536, 1
        %v857 = vrot.slane %v537, 1
        %v858 = vrot.slane %v538, 1
        %v859 = vrot.slane %v539, 1
        %v860 = vrot.slane %v540, 1
        %v861 = vrot.slane %v541, 1
        %v862 = vrot.slane %v542, 1
        %v863 = vrot.slane %v543, 1
        %v864 = vrot.slane %v544, 1
        %v865 = vrot.slane %v545, 1
        %v866 = vrot.slane %v546, 1
        %v867 = vrot.slane %v547, 1
        %v868 = vrot.slane %v548, 1
        %v869 = vrot.slane %v549, 1
        %870 = vrot.lane.b32.xlu0 %v838, 64
        %v871 = vpop.permute.xlu0 %870
        %872 = vrot.lane.b32.xlu0 %v839, 64
        %v873 = vpop.permute.xlu0 %872
        %874 = vrot.lane.b32.xlu0 %v840, 64
        %v875 = vpop.permute.xlu0 %874
        %876 = vrot.lane.b32.xlu0 %v841, 64
        %v877 = vpop.permute.xlu0 %876
        %878 = vrot.lane.b32.xlu0 %v842, 64
        %v879 = vpop.permute.xlu0 %878
        %880 = vrot.lane.b32.xlu0 %v843, 64
        %v881 = vpop.permute.xlu0 %880
        %882 = vrot.lane.b32.xlu0 %v844, 64
        %v883 = vpop.permute.xlu0 %882
        %884 = vrot.lane.b32.xlu0 %v845, 64
        %v885 = vpop.permute.xlu0 %884
        %886 = vrot.lane.b32.xlu0 %v846, 64
        %v887 = vpop.permute.xlu0 %886
        %888 = vrot.lane.b32.xlu0 %v847, 64
        %v889 = vpop.permute.xlu0 %888
        %890 = vrot.lane.b32.xlu0 %v848, 64
        %v891 = vpop.permute.xlu0 %890
        %892 = vrot.lane.b32.xlu0 %v849, 64
        %v893 = vpop.permute.xlu0 %892
        %894 = vrot.lane.b32.xlu0 %v850, 64
        %v895 = vpop.permute.xlu0 %894
        %896 = vrot.lane.b32.xlu0 %v851, 64
        %v897 = vpop.permute.xlu0 %896
        %898 = vrot.lane.b32.xlu0 %v852, 64
        %v899 = vpop.permute.xlu0 %898
        %900 = vrot.lane.b32.xlu0 %v853, 64
        %v901 = vpop.permute.xlu0 %900
        %902 = vrot.lane.b32.xlu0 %v854, 64
        %v903 = vpop.permute.xlu0 %902
        %904 = vrot.lane.b32.xlu0 %v855, 64
        %v905 = vpop.permute.xlu0 %904
        %906 = vrot.lane.b32.xlu0 %v856, 64
        %v907 = vpop.permute.xlu0 %906
        %908 = vrot.lane.b32.xlu0 %v857, 64
        %v909 = vpop.permute.xlu0 %908
        %910 = vrot.lane.b32.xlu0 %v858, 64
        %v911 = vpop.permute.xlu0 %910
        %912 = vrot.lane.b32.xlu0 %v859, 64
        %v913 = vpop.permute.xlu0 %912
        %914 = vrot.lane.b32.xlu0 %v860, 64
        %v915 = vpop.permute.xlu0 %914
        %916 = vrot.lane.b32.xlu0 %v861, 64
        %v917 = vpop.permute.xlu0 %916
        %918 = vrot.lane.b32.xlu0 %v862, 64
        %v919 = vpop.permute.xlu0 %918
        %920 = vrot.lane.b32.xlu0 %v863, 64
        %v921 = vpop.permute.xlu0 %920
        %922 = vrot.lane.b32.xlu0 %v864, 64
        %v923 = vpop.permute.xlu0 %922
        %924 = vrot.lane.b32.xlu0 %v865, 64
        %v925 = vpop.permute.xlu0 %924
        %926 = vrot.lane.b32.xlu0 %v866, 64
        %v927 = vpop.permute.xlu0 %926
        %928 = vrot.lane.b32.xlu0 %v867, 64
        %v929 = vpop.permute.xlu0 %928
        %930 = vrot.lane.b32.xlu0 %v868, 64
        %v931 = vpop.permute.xlu0 %930
        %932 = vrot.lane.b32.xlu0 %v869, 64
        %v933 = vpop.permute.xlu0 %932
        %v934 = vrot.slane %v551, 1
        %v935 = vrot.slane %v553, 2
        %v936 = vor.u32 %v934, %v935
        %v937 = vrot.slane %v558, 1
        %v938 = vrot.slane %v560, 2
        %v939 = vor.u32 %v937, %v938
        %v940 = vrot.slane %v565, 1
        %v941 = vrot.slane %v567, 2
        %v942 = vor.u32 %v940, %v941
        %v943 = vrot.slane %v572, 1
        %v944 = vrot.slane %v574, 2
        %v945 = vor.u32 %v943, %v944
        %v946 = vrot.slane %v579, 1
        %v947 = vrot.slane %v581, 2
        %v948 = vor.u32 %v946, %v947
        %v949 = vrot.slane %v586, 1
        %v950 = vrot.slane %v588, 2
        %v951 = vor.u32 %v949, %v950
        %v952 = vrot.slane %v593, 1
        %v953 = vrot.slane %v595, 2
        %v954 = vor.u32 %v952, %v953
        %v955 = vrot.slane %v600, 1
        %v956 = vrot.slane %v602, 2
        %v957 = vor.u32 %v955, %v956
        %v958 = vrot.slane %v607, 1
        %v959 = vrot.slane %v609, 2
        %v960 = vor.u32 %v958, %v959
        %v961 = vrot.slane %v614, 1
        %v962 = vrot.slane %v616, 2
        %v963 = vor.u32 %v961, %v962
        %v964 = vrot.slane %v621, 1
        %v965 = vrot.slane %v623, 2
        %v966 = vor.u32 %v964, %v965
        %v967 = vrot.slane %v628, 1
        %v968 = vrot.slane %v630, 2
        %v969 = vor.u32 %v967, %v968
        %v970 = vrot.slane %v635, 1
        %v971 = vrot.slane %v637, 2
        %v972 = vor.u32 %v970, %v971
        %v973 = vrot.slane %v642, 1
        %v974 = vrot.slane %v644, 2
        %v975 = vor.u32 %v973, %v974
        %v976 = vrot.slane %v649, 1
        %v977 = vrot.slane %v651, 2
        %v978 = vor.u32 %v976, %v977
        %v979 = vrot.slane %v656, 1
        %v980 = vrot.slane %v658, 2
        %v981 = vor.u32 %v979, %v980
        %v982 = vrot.slane %v663, 1
        %v983 = vrot.slane %v665, 2
        %v984 = vor.u32 %v982, %v983
        %v985 = vrot.slane %v670, 1
        %v986 = vrot.slane %v672, 2
        %v987 = vor.u32 %v985, %v986
        %v988 = vrot.slane %v677, 1
        %v989 = vrot.slane %v679, 2
        %v990 = vor.u32 %v988, %v989
        %v991 = vrot.slane %v684, 1
        %v992 = vrot.slane %v686, 2
        %v993 = vor.u32 %v991, %v992
        %v994 = vrot.slane %v691, 1
        %v995 = vrot.slane %v693, 2
        %v996 = vor.u32 %v994, %v995
        %v997 = vrot.slane %v698, 1
        %v998 = vrot.slane %v700, 2
        %v999 = vor.u32 %v997, %v998
        %v1000 = vrot.slane %v705, 1
        %v1001 = vrot.slane %v707, 2
        %v1002 = vor.u32 %v1000, %v1001
        %v1003 = vrot.slane %v712, 1
        %v1004 = vrot.slane %v714, 2
        %v1005 = vor.u32 %v1003, %v1004
        %v1006 = vrot.slane %v719, 1
        %v1007 = vrot.slane %v721, 2
        %v1008 = vor.u32 %v1006, %v1007
        %v1009 = vrot.slane %v726, 1
        %v1010 = vrot.slane %v728, 2
        %v1011 = vor.u32 %v1009, %v1010
        %v1012 = vrot.slane %v733, 1
        %v1013 = vrot.slane %v735, 2
        %v1014 = vor.u32 %v1012, %v1013
        %v1015 = vrot.slane %v740, 1
        %v1016 = vrot.slane %v742, 2
        %v1017 = vor.u32 %v1015, %v1016
        %v1018 = vrot.slane %v747, 1
        %v1019 = vrot.slane %v749, 2
        %v1020 = vor.u32 %v1018, %v1019
        %v1021 = vrot.slane %v754, 1
        %v1022 = vrot.slane %v756, 2
        %v1023 = vor.u32 %v1021, %v1022
        %v1024 = vrot.slane %v761, 1
        %v1025 = vrot.slane %v763, 2
        %v1026 = vor.u32 %v1024, %v1025
        %v1027 = vrot.slane %v768, 1
        %v1028 = vrot.slane %v770, 2
        %v1029 = vor.u32 %v1027, %v1028
        %1030 = vrot.lane.b32.xlu0 %v936, 96
        %v1031 = vpop.permute.xlu0 %1030
        %1032 = vrot.lane.b32.xlu0 %v939, 96
        %v1033 = vpop.permute.xlu0 %1032
        %1034 = vrot.lane.b32.xlu0 %v942, 96
        %v1035 = vpop.permute.xlu0 %1034
        %1036 = vrot.lane.b32.xlu0 %v945, 96
        %v1037 = vpop.permute.xlu0 %1036
        %1038 = vrot.lane.b32.xlu0 %v948, 96
        %v1039 = vpop.permute.xlu0 %1038
        %1040 = vrot.lane.b32.xlu0 %v951, 96
        %v1041 = vpop.permute.xlu0 %1040
        %1042 = vrot.lane.b32.xlu0 %v954, 96
        %v1043 = vpop.permute.xlu0 %1042
        %1044 = vrot.lane.b32.xlu0 %v957, 96
        %v1045 = vpop.permute.xlu0 %1044
        %1046 = vrot.lane.b32.xlu0 %v960, 96
        %v1047 = vpop.permute.xlu0 %1046
        %1048 = vrot.lane.b32.xlu0 %v963, 96
        %v1049 = vpop.permute.xlu0 %1048
        %1050 = vrot.lane.b32.xlu0 %v966, 96
        %v1051 = vpop.permute.xlu0 %1050
        %1052 = vrot.lane.b32.xlu0 %v969, 96
        %v1053 = vpop.permute.xlu0 %1052
        %1054 = vrot.lane.b32.xlu0 %v972, 96
        %v1055 = vpop.permute.xlu0 %1054
        %1056 = vrot.lane.b32.xlu0 %v975, 96
        %v1057 = vpop.permute.xlu0 %1056
        %1058 = vrot.lane.b32.xlu0 %v978, 96
        %v1059 = vpop.permute.xlu0 %1058
        %1060 = vrot.lane.b32.xlu0 %v981, 96
        %v1061 = vpop.permute.xlu0 %1060
        %1062 = vrot.lane.b32.xlu0 %v984, 96
        %v1063 = vpop.permute.xlu0 %1062
        %1064 = vrot.lane.b32.xlu0 %v987, 96
        %v1065 = vpop.permute.xlu0 %1064
        %1066 = vrot.lane.b32.xlu0 %v990, 96
        %v1067 = vpop.permute.xlu0 %1066
        %1068 = vrot.lane.b32.xlu0 %v993, 96
        %v1069 = vpop.permute.xlu0 %1068
        %1070 = vrot.lane.b32.xlu0 %v996, 96
        %v1071 = vpop.permute.xlu0 %1070
        %1072 = vrot.lane.b32.xlu0 %v999, 96
        %v1073 = vpop.permute.xlu0 %1072
        %1074 = vrot.lane.b32.xlu0 %v1002, 96
        %v1075 = vpop.permute.xlu0 %1074
        %1076 = vrot.lane.b32.xlu0 %v1005, 96
        %v1077 = vpop.permute.xlu0 %1076
        %1078 = vrot.lane.b32.xlu0 %v1008, 96
        %v1079 = vpop.permute.xlu0 %1078
        %1080 = vrot.lane.b32.xlu0 %v1011, 96
        %v1081 = vpop.permute.xlu0 %1080
        %1082 = vrot.lane.b32.xlu0 %v1014, 96
        %v1083 = vpop.permute.xlu0 %1082
        %1084 = vrot.lane.b32.xlu0 %v1017, 96
        %v1085 = vpop.permute.xlu0 %1084
        %1086 = vrot.lane.b32.xlu0 %v1020, 96
        %v1087 = vpop.permute.xlu0 %1086
        %1088 = vrot.lane.b32.xlu0 %v1023, 96
        %v1089 = vpop.permute.xlu0 %1088
        %1090 = vrot.lane.b32.xlu0 %v1026, 96
        %v1091 = vpop.permute.xlu0 %1090
        %1092 = vrot.lane.b32.xlu0 %v1029, 96
        %v1093 = vpop.permute.xlu0 %1092
        %v1094 = vrot.slane %v518, 2
        %v1095 = vrot.slane %v519, 2
        %v1096 = vrot.slane %v520, 2
        %v1097 = vrot.slane %v521, 2
        %v1098 = vrot.slane %v522, 2
        %v1099 = vrot.slane %v523, 2
        %v1100 = vrot.slane %v524, 2
        %v1101 = vrot.slane %v525, 2
        %v1102 = vrot.slane %v526, 2
        %v1103 = vrot.slane %v527, 2
        %v1104 = vrot.slane %v528, 2
        %v1105 = vrot.slane %v529, 2
        %v1106 = vrot.slane %v530, 2
        %v1107 = vrot.slane %v531, 2
        %v1108 = vrot.slane %v532, 2
        %v1109 = vrot.slane %v533, 2
        %v1110 = vrot.slane %v534, 2
        %v1111 = vrot.slane %v535, 2
        %v1112 = vrot.slane %v536, 2
        %v1113 = vrot.slane %v537, 2
        %v1114 = vrot.slane %v538, 2
        %v1115 = vrot.slane %v539, 2
        %v1116 = vrot.slane %v540, 2
        %v1117 = vrot.slane %v541, 2
        %v1118 = vrot.slane %v542, 2
        %v1119 = vrot.slane %v543, 2
        %v1120 = vrot.slane %v544, 2
        %v1121 = vrot.slane %v545, 2
        %v1122 = vrot.slane %v546, 2
        %v1123 = vrot.slane %v547, 2
        %v1124 = vrot.slane %v548, 2
        %v1125 = vrot.slane %v549, 2
        %vm1126 = vcmask 261120
        %v1129 = vsel %vm1126, %v326, %v775
        %v1132 = vsel %vm1126, %v328, %v777
        %v1135 = vsel %vm1126, %v330, %v779
        %v1138 = vsel %vm1126, %v332, %v781
        %v1141 = vsel %vm1126, %v334, %v783
        %v1144 = vsel %vm1126, %v336, %v785
        %v1147 = vsel %vm1126, %v338, %v787
        %v1150 = vsel %vm1126, %v340, %v789
        %v1153 = vsel %vm1126, %v342, %v791
        %v1156 = vsel %vm1126, %v344, %v793
        %v1159 = vsel %vm1126, %v346, %v795
        %v1162 = vsel %vm1126, %v348, %v797
        %v1165 = vsel %vm1126, %v350, %v799
        %v1168 = vsel %vm1126, %v352, %v801
        %v1171 = vsel %vm1126, %v354, %v803
        %v1174 = vsel %vm1126, %v356, %v805
        %v1177 = vsel %vm1126, %v358, %v807
        %v1180 = vsel %vm1126, %v360, %v809
        %v1183 = vsel %vm1126, %v362, %v811
        %v1186 = vsel %vm1126, %v364, %v813
        %v1189 = vsel %vm1126, %v366, %v815
        %v1192 = vsel %vm1126, %v368, %v817
        %v1195 = vsel %vm1126, %v370, %v819
        %v1198 = vsel %vm1126, %v372, %v821
        %v1201 = vsel %vm1126, %v374, %v823
        %v1204 = vsel %vm1126, %v376, %v825
        %v1207 = vsel %vm1126, %v378, %v827
        %v1210 = vsel %vm1126, %v380, %v829
        %v1213 = vsel %vm1126, %v382, %v831
        %v1216 = vsel %vm1126, %v384, %v833
        %v1219 = vsel %vm1126, %v386, %v835
        %v1222 = vsel %vm1126, %v388, %v837
        %vm1223 = vcmask 523264
        %v1225 = vsel %vm1223, %v1129, %v871
        %v1227 = vsel %vm1223, %v1132, %v873
        %v1229 = vsel %vm1223, %v1135, %v875
        %v1231 = vsel %vm1223, %v1138, %v877
        %v1233 = vsel %vm1223, %v1141, %v879
        %v1235 = vsel %vm1223, %v1144, %v881
        %v1237 = vsel %vm1223, %v1147, %v883
        %v1239 = vsel %vm1223, %v1150, %v885
        %v1241 = vsel %vm1223, %v1153, %v887
        %v1243 = vsel %vm1223, %v1156, %v889
        %v1245 = vsel %vm1223, %v1159, %v891
        %v1247 = vsel %vm1223, %v1162, %v893
        %v1249 = vsel %vm1223, %v1165, %v895
        %v1251 = vsel %vm1223, %v1168, %v897
        %v1253 = vsel %vm1223, %v1171, %v899
        %v1255 = vsel %vm1223, %v1174, %v901
        %v1257 = vsel %vm1223, %v1177, %v903
        %v1259 = vsel %vm1223, %v1180, %v905
        %v1261 = vsel %vm1223, %v1183, %v907
        %v1263 = vsel %vm1223, %v1186, %v909
        %v1265 = vsel %vm1223, %v1189, %v911
        %v1267 = vsel %vm1223, %v1192, %v913
        %v1269 = vsel %vm1223, %v1195, %v915
        %v1271 = vsel %vm1223, %v1198, %v917
        %v1273 = vsel %vm1223, %v1201, %v919
        %v1275 = vsel %vm1223, %v1204, %v921
        %v1277 = vsel %vm1223, %v1207, %v923
        %v1279 = vsel %vm1223, %v1210, %v925
        %v1281 = vsel %vm1223, %v1213, %v927
        %v1283 = vsel %vm1223, %v1216, %v929
        %v1285 = vsel %vm1223, %v1219, %v931
        %v1287 = vsel %vm1223, %v1222, %v933
        %vm1288 = vcmask 785408
        %v1290 = vsel %vm1288, %v1225, %v1031
        %v1292 = vsel %vm1288, %v1227, %v1033
        %v1294 = vsel %vm1288, %v1229, %v1035
        %v1296 = vsel %vm1288, %v1231, %v1037
        %v1298 = vsel %vm1288, %v1233, %v1039
        %v1300 = vsel %vm1288, %v1235, %v1041
        %v1302 = vsel %vm1288, %v1237, %v1043
        %v1304 = vsel %vm1288, %v1239, %v1045
        %v1306 = vsel %vm1288, %v1241, %v1047
        %v1308 = vsel %vm1288, %v1243, %v1049
        %v1310 = vsel %vm1288, %v1245, %v1051
        %v1312 = vsel %vm1288, %v1247, %v1053
        %v1314 = vsel %vm1288, %v1249, %v1055
        %v1316 = vsel %vm1288, %v1251, %v1057
        %v1318 = vsel %vm1288, %v1253, %v1059
        %v1320 = vsel %vm1288, %v1255, %v1061
        %v1322 = vsel %vm1288, %v1257, %v1063
        %v1324 = vsel %vm1288, %v1259, %v1065
        %v1326 = vsel %vm1288, %v1261, %v1067
        %v1328 = vsel %vm1288, %v1263, %v1069
        %v1330 = vsel %vm1288, %v1265, %v1071
        %v1332 = vsel %vm1288, %v1267, %v1073
        %v1334 = vsel %vm1288, %v1269, %v1075
        %v1336 = vsel %vm1288, %v1271, %v1077
        %v1338 = vsel %vm1288, %v1273, %v1079
        %v1340 = vsel %vm1288, %v1275, %v1081
        %v1342 = vsel %vm1288, %v1277, %v1083
        %v1344 = vsel %vm1288, %v1279, %v1085
        %v1346 = vsel %vm1288, %v1281, %v1087
        %v1348 = vsel %vm1288, %v1283, %v1089
        %v1350 = vsel %vm1288, %v1285, %v1091
        %v1352 = vsel %vm1288, %v1287, %v1093
        %v1385 = vunpack.c.l.b16 %v1290
        %v1386 = vunpack.c.l.b16 %v1094
        %v1387 = vunpack.c.l.b16 %v1292
        %v1388 = vunpack.c.l.b16 %v1095
        %v1389 = vunpack.c.l.b16 %v1294
        %v1390 = vunpack.c.l.b16 %v1096
        %v1391 = vunpack.c.l.b16 %v1296
        %v1392 = vunpack.c.l.b16 %v1097
        %v1393 = vunpack.c.l.b16 %v1298
        %v1394 = vunpack.c.l.b16 %v1098
        %v1395 = vunpack.c.l.b16 %v1300
        %v1396 = vunpack.c.l.b16 %v1099
        %v1397 = vunpack.c.l.b16 %v1302
        %v1398 = vunpack.c.l.b16 %v1100
        %v1399 = vunpack.c.l.b16 %v1304
        %v1400 = vunpack.c.l.b16 %v1101
        %v1401 = vunpack.c.l.b16 %v1306
        %v1402 = vunpack.c.l.b16 %v1102
        %v1403 = vunpack.c.l.b16 %v1308
        %v1404 = vunpack.c.l.b16 %v1103
        %v1405 = vunpack.c.l.b16 %v1310
        %v1406 = vunpack.c.l.b16 %v1104
        %v1407 = vunpack.c.l.b16 %v1312
        %v1408 = vunpack.c.l.b16 %v1105
        %v1409 = vunpack.c.l.b16 %v1314
        %v1410 = vunpack.c.l.b16 %v1106
        %v1411 = vunpack.c.l.b16 %v1316
        %v1412 = vunpack.c.l.b16 %v1107
        %v1413 = vunpack.c.l.b16 %v1318
        %v1414 = vunpack.c.l.b16 %v1108
        %v1415 = vunpack.c.l.b16 %v1320
        %v1416 = vunpack.c.l.b16 %v1109
        %v1417 = vunpack.c.l.b16 %v1322
        %v1418 = vunpack.c.l.b16 %v1110
        %v1419 = vunpack.c.l.b16 %v1324
        %v1420 = vunpack.c.l.b16 %v1111
        %v1421 = vunpack.c.l.b16 %v1326
        %v1422 = vunpack.c.l.b16 %v1112
        %v1423 = vunpack.c.l.b16 %v1328
        %v1424 = vunpack.c.l.b16 %v1113
        %v1425 = vunpack.c.l.b16 %v1330
        %v1426 = vunpack.c.l.b16 %v1114
        %v1427 = vunpack.c.l.b16 %v1332
        %v1428 = vunpack.c.l.b16 %v1115
        %v1429 = vunpack.c.l.b16 %v1334
        %v1430 = vunpack.c.l.b16 %v1116
        %v1431 = vunpack.c.l.b16 %v1336
        %v1432 = vunpack.c.l.b16 %v1117
        %v1433 = vunpack.c.l.b16 %v1338
        %v1434 = vunpack.c.l.b16 %v1118
        %v1435 = vunpack.c.l.b16 %v1340
        %v1436 = vunpack.c.l.b16 %v1119
        %v1437 = vunpack.c.l.b16 %v1342
        %v1438 = vunpack.c.l.b16 %v1120
        %v1439 = vunpack.c.l.b16 %v1344
        %v1440 = vunpack.c.l.b16 %v1121
        %v1441 = vunpack.c.l.b16 %v1346
        %v1442 = vunpack.c.l.b16 %v1122
        %v1443 = vunpack.c.l.b16 %v1348
        %v1444 = vunpack.c.l.b16 %v1123
        %v1445 = vunpack.c.l.b16 %v1350
        %v1446 = vunpack.c.l.b16 %v1124
        %v1447 = vunpack.c.l.b16 %v1352
        %v1448 = vunpack.c.l.b16 %v1125
        %v1449 = vld [vmem:[%s312] sm:$0xf]
        %v1450 = vld [vmem:[%s312 + $0x4] sm:$0xf]
        %v1451 = vld [vmem:[%s312 + $0x8] sm:$0xf]
        %v1452 = vld [vmem:[%s312 + $0xc] sm:$0xf]
        %v1453 = vld [vmem:[%s312 + $0x10] sm:$0xf]
        %v1454 = vld [vmem:[%s312 + $0x14] sm:$0xf]
        %v1455 = vld [vmem:[%s312 + $0x18] sm:$0xf]
        %v1456 = vld [vmem:[%s312 + $0x1c] sm:$0xf]
        %v1457 = vld [vmem:[%s312 + $0x20] sm:$0xf]
        %v1458 = vld [vmem:[%s312 + $0x24] sm:$0xf]
        %v1459 = vld [vmem:[%s312 + $0x28] sm:$0xf]
        %v1460 = vld [vmem:[%s312 + $0x2c] sm:$0xf]
        %v1461 = vld [vmem:[%s312 + $0x30] sm:$0xf]
        %v1462 = vld [vmem:[%s312 + $0x34] sm:$0xf]
        %v1463 = vld [vmem:[%s312 + $0x38] sm:$0xf]
        %v1464 = vld [vmem:[%s312 + $0x3c] sm:$0xf]
        %v1465 = vld [vmem:[%s312 + $0x40] sm:$0xf]
        %v1466 = vld [vmem:[%s312 + $0x44] sm:$0xf]
        %v1467 = vld [vmem:[%s312 + $0x48] sm:$0xf]
        %v1468 = vld [vmem:[%s312 + $0x4c] sm:$0xf]
        %v1469 = vld [vmem:[%s315] sm:$0x1]
        %v1471 = vperm.slane %v1469, 0
        %v1473 = vpack.c.b16 %v1387, %v1385
        %v1474 = vpack.c.b16 %v1388, %v1386
        %v1475 = vpack.c.b16 %v1391, %v1389
        %v1476 = vpack.c.b16 %v1392, %v1390
        %v1477 = vpack.c.b16 %v1395, %v1393
        %v1478 = vpack.c.b16 %v1396, %v1394
        %v1479 = vpack.c.b16 %v1399, %v1397
        %v1480 = vpack.c.b16 %v1400, %v1398
        %v1481 = vpack.c.b16 %v1403, %v1401
        %v1482 = vpack.c.b16 %v1404, %v1402
        %v1483 = vpack.c.b16 %v1407, %v1405
        %v1484 = vpack.c.b16 %v1408, %v1406
        %v1485 = vpack.c.b16 %v1411, %v1409
        %v1486 = vpack.c.b16 %v1412, %v1410
        %v1487 = vpack.c.b16 %v1415, %v1413
        %v1488 = vpack.c.b16 %v1416, %v1414
        %v1489 = vpack.c.b16 %v1419, %v1417
        %v1490 = vpack.c.b16 %v1420, %v1418
        %v1491 = vpack.c.b16 %v1423, %v1421
        %v1492 = vpack.c.b16 %v1424, %v1422
        %v1493 = vpack.c.b16 %v1427, %v1425
        %v1494 = vpack.c.b16 %v1428, %v1426
        %v1495 = vpack.c.b16 %v1431, %v1429
        %v1496 = vpack.c.b16 %v1432, %v1430
        %v1497 = vpack.c.b16 %v1435, %v1433
        %v1498 = vpack.c.b16 %v1436, %v1434
        %v1499 = vpack.c.b16 %v1439, %v1437
        %v1500 = vpack.c.b16 %v1440, %v1438
        %v1501 = vpack.c.b16 %v1443, %v1441
        %v1502 = vpack.c.b16 %v1444, %v1442
        %v1503 = vpack.c.b16 %v1447, %v1445
        %v1504 = vpack.c.b16 %v1448, %v1446
        %v1541 = vunpack.c.l.b16 %v1449
        %v1542 = vunpack.c.l.b16 %v1450
        %v1543 = vunpack.c.l.b16 %v1451
        %v1544 = vunpack.c.l.b16 %v1452
        %v1545 = vunpack.c.l.b16 %v1453
        %v1546 = vunpack.c.l.b16 %v1454
        %v1547 = vunpack.c.l.b16 %v1455
        %v1548 = vunpack.c.l.b16 %v1456
        %v1549 = vunpack.c.l.b16 %v1457
        %v1550 = vunpack.c.l.b16 %v1458
        %v1551 = vunpack.c.l.b16 %v1459
        %v1552 = vunpack.c.l.b16 %v1460
        %v1553 = vunpack.c.l.b16 %v1461
        %v1554 = vunpack.c.l.b16 %v1462
        %v1555 = vunpack.c.l.b16 %v1463
        %v1556 = vunpack.c.l.b16 %v1464
        %v1557 = vunpack.c.l.b16 %v1465
        %v1558 = vunpack.c.l.b16 %v1466
        %v1559 = vunpack.c.l.b16 %v1467
        %v1560 = vunpack.c.l.b16 %v1468
        %v1561 = vpack.c.b16 %v1542, %v1541
        %v1562 = vpack.c.b16 %v1544, %v1543
        %v1563 = vpack.c.b16 %v1546, %v1545
        %v1564 = vpack.c.b16 %v1548, %v1547
        %v1565 = vpack.c.b16 %v1550, %v1549
        %v1566 = vpack.c.b16 %v1552, %v1551
        %v1567 = vpack.c.b16 %v1554, %v1553
        %v1568 = vpack.c.b16 %v1556, %v1555
        %v1569 = vpack.c.b16 %v1558, %v1557
        %v1570 = vpack.c.b16 %v1560, %v1559
        %v1582 = vsel %vm1126, %v1474, 0
        %v1585 = vsel %vm1126, %v1476, 0
        %v1588 = vsel %vm1126, %v1478, 0
        %v1591 = vsel %vm1126, %v1480, 0
        %v1594 = vsel %vm1126, %v1482, 0
        %v1597 = vsel %vm1126, %v1484, 0
        %v1600 = vsel %vm1126, %v1486, 0
        %v1603 = vsel %vm1126, %v1488, 0
        %v1606 = vsel %vm1126, %v1490, 0
        %v1609 = vsel %vm1126, %v1492, 0
        %v1612 = vsel %vm1126, %v1494, 0
        %v1615 = vsel %vm1126, %v1496, 0
        %v1618 = vsel %vm1126, %v1498, 0
        %v1621 = vsel %vm1126, %v1500, 0
        %v1624 = vsel %vm1126, %v1502, 0
        %v1627 = vsel %vm1126, %v1504, 0
        %1629 = vmatpush.bf16.msra.mxu0 %v1568
        %1630 = vmatpush.bf16.msra.mxu0 %v1567
        %1631 = vmatpush.bf16.msra.mxu0 %v1566
        %1632 = vmatpush.bf16.msra.mxu0 %v1565
        %1633 = vmatpush.bf16.msra.mxu0 %v1564
        %1634 = vmatpush.bf16.msra.mxu0 %v1563
        %1635 = vmatpush.bf16.msra.mxu0 %v1562
        %1636 = vmatpush.bf16.msra.mxu0 %v1561
        %1637 = vmatmul.bf16.gmra.mxu0 %v1473
        %v1638 = vpop.f32.mrf.mxu0
        %v1639 = vadd.f32 %v1471, %v1638
        %v1640 = vpop.f32.mrf.mxu0
        %v1641 = vadd.f32 %v1471, %v1640
        %1642 = vmatmul.bf16.gmra.mxu0 %v1475
        %v1643 = vpop.f32.mrf.mxu0
        %v1644 = vadd.f32 %v1471, %v1643
        %v1645 = vpop.f32.mrf.mxu0
        %v1646 = vadd.f32 %v1471, %v1645
        %1647 = vmatmul.bf16.gmra.mxu0 %v1477
        %v1648 = vpop.f32.mrf.mxu0
        %v1649 = vadd.f32 %v1471, %v1648
        %v1650 = vpop.f32.mrf.mxu0
        %v1651 = vadd.f32 %v1471, %v1650
        %1652 = vmatmul.bf16.gmra.mxu0 %v1479
        %v1653 = vpop.f32.mrf.mxu0
        %v1654 = vadd.f32 %v1471, %v1653
        %v1655 = vpop.f32.mrf.mxu0
        %v1656 = vadd.f32 %v1471, %v1655
        %1657 = vmatmul.bf16.gmra.mxu0 %v1481
        %v1658 = vpop.f32.mrf.mxu0
        %v1659 = vadd.f32 %v1471, %v1658
        %v1660 = vpop.f32.mrf.mxu0
        %v1661 = vadd.f32 %v1471, %v1660
        %1662 = vmatmul.bf16.gmra.mxu0 %v1483
        %v1663 = vpop.f32.mrf.mxu0
        %v1664 = vadd.f32 %v1471, %v1663
        %v1665 = vpop.f32.mrf.mxu0
        %v1666 = vadd.f32 %v1471, %v1665
        %1667 = vmatmul.bf16.gmra.mxu0 %v1485
        %v1668 = vpop.f32.mrf.mxu0
        %v1669 = vadd.f32 %v1471, %v1668
        %v1670 = vpop.f32.mrf.mxu0
        %v1671 = vadd.f32 %v1471, %v1670
        %1672 = vmatmul.bf16.gmra.mxu0 %v1487
        %v1673 = vpop.f32.mrf.mxu0
        %v1674 = vadd.f32 %v1471, %v1673
        %v1675 = vpop.f32.mrf.mxu0
        %v1676 = vadd.f32 %v1471, %v1675
        %1677 = vmatmul.bf16.gmra.mxu0 %v1489
        %v1678 = vpop.f32.mrf.mxu0
        %v1679 = vadd.f32 %v1471, %v1678
        %v1680 = vpop.f32.mrf.mxu0
        %v1681 = vadd.f32 %v1471, %v1680
        %1682 = vmatmul.bf16.gmra.mxu0 %v1491
        %v1683 = vpop.f32.mrf.mxu0
        %v1684 = vadd.f32 %v1471, %v1683
        %v1685 = vpop.f32.mrf.mxu0
        %v1686 = vadd.f32 %v1471, %v1685
        %1687 = vmatmul.bf16.gmra.mxu0 %v1493
        %v1688 = vpop.f32.mrf.mxu0
        %v1689 = vadd.f32 %v1471, %v1688
        %v1690 = vpop.f32.mrf.mxu0
        %v1691 = vadd.f32 %v1471, %v1690
        %1692 = vmatmul.bf16.gmra.mxu0 %v1495
        %v1693 = vpop.f32.mrf.mxu0
        %v1694 = vadd.f32 %v1471, %v1693
        %v1695 = vpop.f32.mrf.mxu0
        %v1696 = vadd.f32 %v1471, %v1695
        %1697 = vmatmul.bf16.gmra.mxu0 %v1497
        %v1698 = vpop.f32.mrf.mxu0
        %v1699 = vadd.f32 %v1471, %v1698
        %v1700 = vpop.f32.mrf.mxu0
        %v1701 = vadd.f32 %v1471, %v1700
        %1702 = vmatmul.bf16.gmra.mxu0 %v1499
        %v1703 = vpop.f32.mrf.mxu0
        %v1704 = vadd.f32 %v1471, %v1703
        %v1705 = vpop.f32.mrf.mxu0
        %v1706 = vadd.f32 %v1471, %v1705
        %1707 = vmatmul.bf16.gmra.mxu0 %v1501
        %v1708 = vpop.f32.mrf.mxu0
        %v1709 = vadd.f32 %v1471, %v1708
        %v1710 = vpop.f32.mrf.mxu0
        %v1711 = vadd.f32 %v1471, %v1710
        %1712 = vmatmul.bf16.gmra.mxu0 %v1503
        %v1713 = vpop.f32.mrf.mxu0
        %v1714 = vadd.f32 %v1471, %v1713
        %v1715 = vpop.f32.mrf.mxu0
        %v1716 = vadd.f32 %v1471, %v1715
        %1717 = vdwg.mxu0
        %1718 = vmatpush.bf16.msra.mxu0 0
        %1719 = vmatpush.bf16.msra.mxu0 0
        %1720 = vmatpush.bf16.msra.mxu0 0
        %1721 = vmatpush.bf16.msra.mxu0 0
        %1722 = vmatpush.bf16.msra.mxu0 0
        %1723 = vmatpush.bf16.msra.mxu0 0
        %1724 = vmatpush.bf16.msra.mxu0 %v1570
        %1725 = vmatpush.bf16.msra.mxu0 %v1569
        %1726 = vmatmul.bf16.gmra.mxu0 %v1582
        %v1727 = vpop.f32.mrf.mxu0
        %v1728 = vadd.f32 %v1639, %v1727
        %v1729 = vpop.f32.mrf.mxu0
        %v1730 = vadd.f32 %v1641, %v1729
        %1731 = vmatmul.bf16.gmra.mxu0 %v1585
        %v1732 = vpop.f32.mrf.mxu0
        %v1733 = vadd.f32 %v1644, %v1732
        %v1734 = vpop.f32.mrf.mxu0
        %v1735 = vadd.f32 %v1646, %v1734
        %1736 = vmatmul.bf16.gmra.mxu0 %v1588
        %v1737 = vpop.f32.mrf.mxu0
        %v1738 = vadd.f32 %v1649, %v1737
        %v1739 = vpop.f32.mrf.mxu0
        %v1740 = vadd.f32 %v1651, %v1739
        %1741 = vmatmul.bf16.gmra.mxu0 %v1591
        %v1742 = vpop.f32.mrf.mxu0
        %v1743 = vadd.f32 %v1654, %v1742
        %v1744 = vpop.f32.mrf.mxu0
        %v1745 = vadd.f32 %v1656, %v1744
        %1746 = vmatmul.bf16.gmra.mxu0 %v1594
        %v1747 = vpop.f32.mrf.mxu0
        %v1748 = vadd.f32 %v1659, %v1747
        %v1749 = vpop.f32.mrf.mxu0
        %v1750 = vadd.f32 %v1661, %v1749
        %1751 = vmatmul.bf16.gmra.mxu0 %v1597
        %v1752 = vpop.f32.mrf.mxu0
        %v1753 = vadd.f32 %v1664, %v1752
        %v1754 = vpop.f32.mrf.mxu0
        %v1755 = vadd.f32 %v1666, %v1754
        %1756 = vmatmul.bf16.gmra.mxu0 %v1600
        %v1757 = vpop.f32.mrf.mxu0
        %v1758 = vadd.f32 %v1669, %v1757
        %v1759 = vpop.f32.mrf.mxu0
        %v1760 = vadd.f32 %v1671, %v1759
        %1761 = vmatmul.bf16.gmra.mxu0 %v1603
        %v1762 = vpop.f32.mrf.mxu0
        %v1763 = vadd.f32 %v1674, %v1762
        %v1764 = vpop.f32.mrf.mxu0
        %v1765 = vadd.f32 %v1676, %v1764
        %1766 = vmatmul.bf16.gmra.mxu0 %v1606
        %v1767 = vpop.f32.mrf.mxu0
        %v1768 = vadd.f32 %v1679, %v1767
        %v1769 = vpop.f32.mrf.mxu0
        %v1770 = vadd.f32 %v1681, %v1769
        %1771 = vmatmul.bf16.gmra.mxu0 %v1609
        %v1772 = vpop.f32.mrf.mxu0
        %v1773 = vadd.f32 %v1684, %v1772
        %v1774 = vpop.f32.mrf.mxu0
        %v1775 = vadd.f32 %v1686, %v1774
        %1776 = vmatmul.bf16.gmra.mxu0 %v1612
        %v1777 = vpop.f32.mrf.mxu0
        %v1778 = vadd.f32 %v1689, %v1777
        %v1779 = vpop.f32.mrf.mxu0
        %v1780 = vadd.f32 %v1691, %v1779
        %1781 = vmatmul.bf16.gmra.mxu0 %v1615
        %v1782 = vpop.f32.mrf.mxu0
        %v1783 = vadd.f32 %v1694, %v1782
        %v1784 = vpop.f32.mrf.mxu0
        %v1785 = vadd.f32 %v1696, %v1784
        %1786 = vmatmul.bf16.gmra.mxu0 %v1618
        %v1787 = vpop.f32.mrf.mxu0
        %v1788 = vadd.f32 %v1699, %v1787
        %v1789 = vpop.f32.mrf.mxu0
        %v1790 = vadd.f32 %v1701, %v1789
        %1791 = vmatmul.bf16.gmra.mxu0 %v1621
        %v1792 = vpop.f32.mrf.mxu0
        %v1793 = vadd.f32 %v1704, %v1792
        %v1794 = vpop.f32.mrf.mxu0
        %v1795 = vadd.f32 %v1706, %v1794
        %1796 = vmatmul.bf16.gmra.mxu0 %v1624
        %v1797 = vpop.f32.mrf.mxu0
        %v1798 = vadd.f32 %v1709, %v1797
        %v1799 = vpop.f32.mrf.mxu0
        %v1800 = vadd.f32 %v1711, %v1799
        %1801 = vmatmul.bf16.gmra.mxu0 %v1627
        %v1802 = vpop.f32.mrf.mxu0
        %v1803 = vadd.f32 %v1714, %v1802
        %v1804 = vpop.f32.mrf.mxu0
        %v1805 = vadd.f32 %v1716, %v1804
        %1806 = vdwg.mxu0
        %v1807 = vmax.f32 %v1728, 0.0
        %v1808 = vmax.f32 %v1730, 0.0
        %v1809 = vmax.f32 %v1733, 0.0
        %v1810 = vmax.f32 %v1735, 0.0
        %v1811 = vmax.f32 %v1738, 0.0
        %v1812 = vmax.f32 %v1740, 0.0
        %v1813 = vmax.f32 %v1743, 0.0
        %v1814 = vmax.f32 %v1745, 0.0
        %v1815 = vmax.f32 %v1748, 0.0
        %v1816 = vmax.f32 %v1750, 0.0
        %v1817 = vmax.f32 %v1753, 0.0
        %v1818 = vmax.f32 %v1755, 0.0
        %v1819 = vmax.f32 %v1758, 0.0
        %v1820 = vmax.f32 %v1760, 0.0
        %v1821 = vmax.f32 %v1763, 0.0
        %v1822 = vmax.f32 %v1765, 0.0
        %v1823 = vmax.f32 %v1768, 0.0
        %v1824 = vmax.f32 %v1770, 0.0
        %v1825 = vmax.f32 %v1773, 0.0
        %v1826 = vmax.f32 %v1775, 0.0
        %v1827 = vmax.f32 %v1778, 0.0
        %v1828 = vmax.f32 %v1780, 0.0
        %v1829 = vmax.f32 %v1783, 0.0
        %v1830 = vmax.f32 %v1785, 0.0
        %v1831 = vmax.f32 %v1788, 0.0
        %v1832 = vmax.f32 %v1790, 0.0
        %v1833 = vmax.f32 %v1793, 0.0
        %v1834 = vmax.f32 %v1795, 0.0
        %v1835 = vmax.f32 %v1798, 0.0
        %v1836 = vmax.f32 %v1800, 0.0
        %v1837 = vmax.f32 %v1803, 0.0
        %v1838 = vmax.f32 %v1805, 0.0
        %v1871 = vrot.slane %v1807, 7
        %v1872 = vrot.slane %v1808, 7
        %v1873 = vrot.slane %v1809, 7
        %v1874 = vrot.slane %v1810, 7
        %v1875 = vrot.slane %v1811, 7
        %v1876 = vrot.slane %v1812, 7
        %v1877 = vrot.slane %v1813, 7
        %v1878 = vrot.slane %v1814, 7
        %v1879 = vrot.slane %v1815, 7
        %v1880 = vrot.slane %v1816, 7
        %v1881 = vrot.slane %v1817, 7
        %v1882 = vrot.slane %v1818, 7
        %v1883 = vrot.slane %v1819, 7
        %v1884 = vrot.slane %v1820, 7
        %v1885 = vrot.slane %v1821, 7
        %v1886 = vrot.slane %v1822, 7
        %v1887 = vrot.slane %v1823, 7
        %v1888 = vrot.slane %v1824, 7
        %v1889 = vrot.slane %v1825, 7
        %v1890 = vrot.slane %v1826, 7
        %v1891 = vrot.slane %v1827, 7
        %v1892 = vrot.slane %v1828, 7
        %v1893 = vrot.slane %v1829, 7
        %v1894 = vrot.slane %v1830, 7
        %v1895 = vrot.slane %v1831, 7
        %v1896 = vrot.slane %v1832, 7
        %v1897 = vrot.slane %v1833, 7
        %v1898 = vrot.slane %v1834, 7
        %v1899 = vrot.slane %v1835, 7
        %v1900 = vrot.slane %v1836, 7
        %v1901 = vrot.slane %v1837, 7
        %v1902 = vrot.slane %v1838, 7
        %vm1935 = vcmask 1040384
        %v1936 = vsel %vm1935, 0.0, %v1871
        %v1937 = vsel %vm1935, 0.0, %v1872
        %v1938 = vsel %vm1935, 0.0, %v1873
        %v1939 = vsel %vm1935, 0.0, %v1874
        %v1940 = vsel %vm1935, 0.0, %v1875
        %v1941 = vsel %vm1935, 0.0, %v1876
        %v1942 = vsel %vm1935, 0.0, %v1877
        %v1943 = vsel %vm1935, 0.0, %v1878
        %v1944 = vsel %vm1935, 0.0, %v1879
        %v1945 = vsel %vm1935, 0.0, %v1880
        %v1946 = vsel %vm1935, 0.0, %v1881
        %v1947 = vsel %vm1935, 0.0, %v1882
        %v1948 = vsel %vm1935, 0.0, %v1883
        %v1949 = vsel %vm1935, 0.0, %v1884
        %v1950 = vsel %vm1935, 0.0, %v1885
        %v1951 = vsel %vm1935, 0.0, %v1886
        %v1952 = vsel %vm1935, 0.0, %v1887
        %v1953 = vsel %vm1935, 0.0, %v1888
        %v1954 = vsel %vm1935, 0.0, %v1889
        %v1955 = vsel %vm1935, 0.0, %v1890
        %v1956 = vsel %vm1935, 0.0, %v1891
        %v1957 = vsel %vm1935, 0.0, %v1892
        %v1958 = vsel %vm1935, 0.0, %v1893
        %v1959 = vsel %vm1935, 0.0, %v1894
        %v1960 = vsel %vm1935, 0.0, %v1895
        %v1961 = vsel %vm1935, 0.0, %v1896
        %v1962 = vsel %vm1935, 0.0, %v1897
        %v1963 = vsel %vm1935, 0.0, %v1898
        %v1964 = vsel %vm1935, 0.0, %v1899
        %v1965 = vsel %vm1935, 0.0, %v1900
        %v1966 = vsel %vm1935, 0.0, %v1901
        %v1967 = vsel %vm1935, 0.0, %v1902
        %v1968 = vsel %vm1935, %v1871, 0.0
        %v1969 = vsel %vm1935, %v1872, 0.0
        %v1970 = vsel %vm1935, %v1873, 0.0
        %v1971 = vsel %vm1935, %v1874, 0.0
        %v1972 = vsel %vm1935, %v1875, 0.0
        %v1973 = vsel %vm1935, %v1876, 0.0
        %v1974 = vsel %vm1935, %v1877, 0.0
        %v1975 = vsel %vm1935, %v1878, 0.0
        %v1976 = vsel %vm1935, %v1879, 0.0
        %v1977 = vsel %vm1935, %v1880, 0.0
        %v1978 = vsel %vm1935, %v1881, 0.0
        %v1979 = vsel %vm1935, %v1882, 0.0
        %v1980 = vsel %vm1935, %v1883, 0.0
        %v1981 = vsel %vm1935, %v1884, 0.0
        %v1982 = vsel %vm1935, %v1885, 0.0
        %v1983 = vsel %vm1935, %v1886, 0.0
        %v1984 = vsel %vm1935, %v1887, 0.0
        %v1985 = vsel %vm1935, %v1888, 0.0
        %v1986 = vsel %vm1935, %v1889, 0.0
        %v1987 = vsel %vm1935, %v1890, 0.0
        %v1988 = vsel %vm1935, %v1891, 0.0
        %v1989 = vsel %vm1935, %v1892, 0.0
        %v1990 = vsel %vm1935, %v1893, 0.0
        %v1991 = vsel %vm1935, %v1894, 0.0
        %v1992 = vsel %vm1935, %v1895, 0.0
        %v1993 = vsel %vm1935, %v1896, 0.0
        %v1994 = vsel %vm1935, %v1897, 0.0
        %v1995 = vsel %vm1935, %v1898, 0.0
        %v1996 = vsel %vm1935, %v1899, 0.0
        %v1997 = vsel %vm1935, %v1900, 0.0
        %v1998 = vsel %vm1935, %v1901, 0.0
        %v1999 = vsel %vm1935, %v1902, 0.0
        %v2000 = vpack.c.bf16 %v1936, %v1936
        %v2001 = vpack.c.bf16 %v1968, %v1968
        %v2002 = vpack.c.bf16 %v1937, %v1937
        %v2003 = vpack.c.bf16 %v1969, %v1969
        %v2004 = vpack.c.bf16 %v1938, %v1938
        %v2005 = vpack.c.bf16 %v1970, %v1970
        %v2006 = vpack.c.bf16 %v1939, %v1939
        %v2007 = vpack.c.bf16 %v1971, %v1971
        %v2008 = vpack.c.bf16 %v1940, %v1940
        %v2009 = vpack.c.bf16 %v1972, %v1972
        %v2010 = vpack.c.bf16 %v1941, %v1941
        %v2011 = vpack.c.bf16 %v1973, %v1973
        %v2012 = vpack.c.bf16 %v1942, %v1942
        %v2013 = vpack.c.bf16 %v1974, %v1974
        %v2014 = vpack.c.bf16 %v1943, %v1943
        %v2015 = vpack.c.bf16 %v1975, %v1975
        %v2016 = vpack.c.bf16 %v1944, %v1944
        %v2017 = vpack.c.bf16 %v1976, %v1976
        %v2018 = vpack.c.bf16 %v1945, %v1945
        %v2019 = vpack.c.bf16 %v1977, %v1977
        %v2020 = vpack.c.bf16 %v1946, %v1946
        %v2021 = vpack.c.bf16 %v1978, %v1978
        %v2022 = vpack.c.bf16 %v1947, %v1947
        %v2023 = vpack.c.bf16 %v1979, %v1979
        %v2024 = vpack.c.bf16 %v1948, %v1948
        %v2025 = vpack.c.bf16 %v1980, %v1980
        %v2026 = vpack.c.bf16 %v1949, %v1949
        %v2027 = vpack.c.bf16 %v1981, %v1981
        %v2028 = vpack.c.bf16 %v1950, %v1950
        %v2029 = vpack.c.bf16 %v1982, %v1982
        %v2030 = vpack.c.bf16 %v1951, %v1951
        %v2031 = vpack.c.bf16 %v1983, %v1983
        %v2032 = vpack.c.bf16 %v1952, %v1952
        %v2033 = vpack.c.bf16 %v1984, %v1984
        %v2034 = vpack.c.bf16 %v1953, %v1953
        %v2035 = vpack.c.bf16 %v1985, %v1985
        %v2036 = vpack.c.bf16 %v1954, %v1954
        %v2037 = vpack.c.bf16 %v1986, %v1986
        %v2038 = vpack.c.bf16 %v1955, %v1955
        %v2039 = vpack.c.bf16 %v1987, %v1987
        %v2040 = vpack.c.bf16 %v1956, %v1956
        %v2041 = vpack.c.bf16 %v1988, %v1988
        %v2042 = vpack.c.bf16 %v1957, %v1957
        %v2043 = vpack.c.bf16 %v1989, %v1989
        %v2044 = vpack.c.bf16 %v1958, %v1958
        %v2045 = vpack.c.bf16 %v1990, %v1990
        %v2046 = vpack.c.bf16 %v1959, %v1959
        %v2047 = vpack.c.bf16 %v1991, %v1991
        %v2048 = vpack.c.bf16 %v1960, %v1960
        %v2049 = vpack.c.bf16 %v1992, %v1992
        %v2050 = vpack.c.bf16 %v1961, %v1961
        %v2051 = vpack.c.bf16 %v1993, %v1993
        %v2052 = vpack.c.bf16 %v1962, %v1962
        %v2053 = vpack.c.bf16 %v1994, %v1994
        %v2054 = vpack.c.bf16 %v1963, %v1963
        %v2055 = vpack.c.bf16 %v1995, %v1995
        %v2056 = vpack.c.bf16 %v1964, %v1964
        %v2057 = vpack.c.bf16 %v1996, %v1996
        %v2058 = vpack.c.bf16 %v1965, %v1965
        %v2059 = vpack.c.bf16 %v1997, %v1997
        %v2060 = vpack.c.bf16 %v1966, %v1966
        %v2061 = vpack.c.bf16 %v1998, %v1998
        %v2062 = vpack.c.bf16 %v1967, %v1967
        %v2063 = vpack.c.bf16 %v1999, %v1999
        %v2128 = vunpack.c.l.b16 %v2000
        %v2129 = vunpack.c.l.b16 %v2001
        %v2130 = vunpack.c.l.b16 %v2002
        %v2131 = vunpack.c.l.b16 %v2003
        %v2132 = vunpack.c.l.b16 %v2004
        %v2133 = vunpack.c.l.b16 %v2005
        %v2134 = vunpack.c.l.b16 %v2006
        %v2135 = vunpack.c.l.b16 %v2007
        %v2136 = vunpack.c.l.b16 %v2008
        %v2137 = vunpack.c.l.b16 %v2009
        %v2138 = vunpack.c.l.b16 %v2010
        %v2139 = vunpack.c.l.b16 %v2011
        %v2140 = vunpack.c.l.b16 %v2012
        %v2141 = vunpack.c.l.b16 %v2013
        %v2142 = vunpack.c.l.b16 %v2014
        %v2143 = vunpack.c.l.b16 %v2015
        %v2144 = vunpack.c.l.b16 %v2016
        %v2145 = vunpack.c.l.b16 %v2017
        %v2146 = vunpack.c.l.b16 %v2018
        %v2147 = vunpack.c.l.b16 %v2019
        %v2148 = vunpack.c.l.b16 %v2020
        %v2149 = vunpack.c.l.b16 %v2021
        %v2150 = vunpack.c.l.b16 %v2022
        %v2151 = vunpack.c.l.b16 %v2023
        %v2152 = vunpack.c.l.b16 %v2024
        %v2153 = vunpack.c.l.b16 %v2025
        %v2154 = vunpack.c.l.b16 %v2026
        %v2155 = vunpack.c.l.b16 %v2027
        %v2156 = vunpack.c.l.b16 %v2028
        %v2157 = vunpack.c.l.b16 %v2029
        %v2158 = vunpack.c.l.b16 %v2030
        %v2159 = vunpack.c.l.b16 %v2031
        %v2160 = vunpack.c.l.b16 %v2032
        %v2161 = vunpack.c.l.b16 %v2033
        %v2162 = vunpack.c.l.b16 %v2034
        %v2163 = vunpack.c.l.b16 %v2035
        %v2164 = vunpack.c.l.b16 %v2036
        %v2165 = vunpack.c.l.b16 %v2037
        %v2166 = vunpack.c.l.b16 %v2038
        %v2167 = vunpack.c.l.b16 %v2039
        %v2168 = vunpack.c.l.b16 %v2040
        %v2169 = vunpack.c.l.b16 %v2041
        %v2170 = vunpack.c.l.b16 %v2042
        %v2171 = vunpack.c.l.b16 %v2043
        %v2172 = vunpack.c.l.b16 %v2044
        %v2173 = vunpack.c.l.b16 %v2045
        %v2174 = vunpack.c.l.b16 %v2046
        %v2175 = vunpack.c.l.b16 %v2047
        %v2176 = vunpack.c.l.b16 %v2048
        %v2177 = vunpack.c.l.b16 %v2049
        %v2178 = vunpack.c.l.b16 %v2050
        %v2179 = vunpack.c.l.b16 %v2051
        %v2180 = vunpack.c.l.b16 %v2052
        %v2181 = vunpack.c.l.b16 %v2053
        %v2182 = vunpack.c.l.b16 %v2054
        %v2183 = vunpack.c.l.b16 %v2055
        %v2184 = vunpack.c.l.b16 %v2056
        %v2185 = vunpack.c.l.b16 %v2057
        %v2186 = vunpack.c.l.b16 %v2058
        %v2187 = vunpack.c.l.b16 %v2059
        %v2188 = vunpack.c.l.b16 %v2060
        %v2189 = vunpack.c.l.b16 %v2061
        %v2190 = vunpack.c.l.b16 %v2062
        %v2191 = vunpack.c.l.b16 %v2063
        %v2192 = vpack.c.b16 %v2129, %v2128
        %v2193 = vpack.c.b16 %v2131, %v2130
        %v2194 = vpack.c.b16 %v2133, %v2132
        %v2195 = vpack.c.b16 %v2135, %v2134
        %v2196 = vpack.c.b16 %v2137, %v2136
        %v2197 = vpack.c.b16 %v2139, %v2138
        %v2198 = vpack.c.b16 %v2141, %v2140
        %v2199 = vpack.c.b16 %v2143, %v2142
        %v2200 = vpack.c.b16 %v2145, %v2144
        %v2201 = vpack.c.b16 %v2147, %v2146
        %v2202 = vpack.c.b16 %v2149, %v2148
        %v2203 = vpack.c.b16 %v2151, %v2150
        %v2204 = vpack.c.b16 %v2153, %v2152
        %v2205 = vpack.c.b16 %v2155, %v2154
        %v2206 = vpack.c.b16 %v2157, %v2156
        %v2207 = vpack.c.b16 %v2159, %v2158
        %v2208 = vpack.c.b16 %v2161, %v2160
        %v2209 = vpack.c.b16 %v2163, %v2162
        %v2210 = vpack.c.b16 %v2165, %v2164
        %v2211 = vpack.c.b16 %v2167, %v2166
        %v2212 = vpack.c.b16 %v2169, %v2168
        %v2213 = vpack.c.b16 %v2171, %v2170
        %v2214 = vpack.c.b16 %v2173, %v2172
        %v2215 = vpack.c.b16 %v2175, %v2174
        %v2216 = vpack.c.b16 %v2177, %v2176
        %v2217 = vpack.c.b16 %v2179, %v2178
        %v2218 = vpack.c.b16 %v2181, %v2180
        %v2219 = vpack.c.b16 %v2183, %v2182
        %v2220 = vpack.c.b16 %v2185, %v2184
        %v2221 = vpack.c.b16 %v2187, %v2186
        %v2222 = vpack.c.b16 %v2189, %v2188
        %v2223 = vpack.c.b16 %v2191, %v2190
        %v2225 = vshrl.u32 %v2192, 16
        %v2227 = vshll.u32 %v2192, 16
        %v2229 = vrot.slane %v2227, 1
        %v2230 = vor.u32 %v2225, %v2229
        %v2232 = vshrl.u32 %v2193, 16
        %v2234 = vshll.u32 %v2193, 16
        %v2236 = vrot.slane %v2234, 1
        %v2237 = vor.u32 %v2232, %v2236
        %v2239 = vshrl.u32 %v2194, 16
        %v2241 = vshll.u32 %v2194, 16
        %v2243 = vrot.slane %v2241, 1
        %v2244 = vor.u32 %v2239, %v2243
        %v2246 = vshrl.u32 %v2195, 16
        %v2248 = vshll.u32 %v2195, 16
        %v2250 = vrot.slane %v2248, 1
        %v2251 = vor.u32 %v2246, %v2250
        %v2253 = vshrl.u32 %v2196, 16
        %v2255 = vshll.u32 %v2196, 16
        %v2257 = vrot.slane %v2255, 1
        %v2258 = vor.u32 %v2253, %v2257
        %v2260 = vshrl.u32 %v2197, 16
        %v2262 = vshll.u32 %v2197, 16
        %v2264 = vrot.slane %v2262, 1
        %v2265 = vor.u32 %v2260, %v2264
        %v2267 = vshrl.u32 %v2198, 16
        %v2269 = vshll.u32 %v2198, 16
        %v2271 = vrot.slane %v2269, 1
        %v2272 = vor.u32 %v2267, %v2271
        %v2274 = vshrl.u32 %v2199, 16
        %v2276 = vshll.u32 %v2199, 16
        %v2278 = vrot.slane %v2276, 1
        %v2279 = vor.u32 %v2274, %v2278
        %v2281 = vshrl.u32 %v2200, 16
        %v2283 = vshll.u32 %v2200, 16
        %v2285 = vrot.slane %v2283, 1
        %v2286 = vor.u32 %v2281, %v2285
        %v2288 = vshrl.u32 %v2201, 16
        %v2290 = vshll.u32 %v2201, 16
        %v2292 = vrot.slane %v2290, 1
        %v2293 = vor.u32 %v2288, %v2292
        %v2295 = vshrl.u32 %v2202, 16
        %v2297 = vshll.u32 %v2202, 16
        %v2299 = vrot.slane %v2297, 1
        %v2300 = vor.u32 %v2295, %v2299
        %v2302 = vshrl.u32 %v2203, 16
        %v2304 = vshll.u32 %v2203, 16
        %v2306 = vrot.slane %v2304, 1
        %v2307 = vor.u32 %v2302, %v2306
        %v2309 = vshrl.u32 %v2204, 16
        %v2311 = vshll.u32 %v2204, 16
        %v2313 = vrot.slane %v2311, 1
        %v2314 = vor.u32 %v2309, %v2313
        %v2316 = vshrl.u32 %v2205, 16
        %v2318 = vshll.u32 %v2205, 16
        %v2320 = vrot.slane %v2318, 1
        %v2321 = vor.u32 %v2316, %v2320
        %v2323 = vshrl.u32 %v2206, 16
        %v2325 = vshll.u32 %v2206, 16
        %v2327 = vrot.slane %v2325, 1
        %v2328 = vor.u32 %v2323, %v2327
        %v2330 = vshrl.u32 %v2207, 16
        %v2332 = vshll.u32 %v2207, 16
        %v2334 = vrot.slane %v2332, 1
        %v2335 = vor.u32 %v2330, %v2334
        %v2337 = vshrl.u32 %v2208, 16
        %v2339 = vshll.u32 %v2208, 16
        %v2341 = vrot.slane %v2339, 1
        %v2342 = vor.u32 %v2337, %v2341
        %v2344 = vshrl.u32 %v2209, 16
        %v2346 = vshll.u32 %v2209, 16
        %v2348 = vrot.slane %v2346, 1
        %v2349 = vor.u32 %v2344, %v2348
        %v2351 = vshrl.u32 %v2210, 16
        %v2353 = vshll.u32 %v2210, 16
        %v2355 = vrot.slane %v2353, 1
        %v2356 = vor.u32 %v2351, %v2355
        %v2358 = vshrl.u32 %v2211, 16
        %v2360 = vshll.u32 %v2211, 16
        %v2362 = vrot.slane %v2360, 1
        %v2363 = vor.u32 %v2358, %v2362
        %v2365 = vshrl.u32 %v2212, 16
        %v2367 = vshll.u32 %v2212, 16
        %v2369 = vrot.slane %v2367, 1
        %v2370 = vor.u32 %v2365, %v2369
        %v2372 = vshrl.u32 %v2213, 16
        %v2374 = vshll.u32 %v2213, 16
        %v2376 = vrot.slane %v2374, 1
        %v2377 = vor.u32 %v2372, %v2376
        %v2379 = vshrl.u32 %v2214, 16
        %v2381 = vshll.u32 %v2214, 16
        %v2383 = vrot.slane %v2381, 1
        %v2384 = vor.u32 %v2379, %v2383
        %v2386 = vshrl.u32 %v2215, 16
        %v2388 = vshll.u32 %v2215, 16
        %v2390 = vrot.slane %v2388, 1
        %v2391 = vor.u32 %v2386, %v2390
        %v2393 = vshrl.u32 %v2216, 16
        %v2395 = vshll.u32 %v2216, 16
        %v2397 = vrot.slane %v2395, 1
        %v2398 = vor.u32 %v2393, %v2397
        %v2400 = vshrl.u32 %v2217, 16
        %v2402 = vshll.u32 %v2217, 16
        %v2404 = vrot.slane %v2402, 1
        %v2405 = vor.u32 %v2400, %v2404
        %v2407 = vshrl.u32 %v2218, 16
        %v2409 = vshll.u32 %v2218, 16
        %v2411 = vrot.slane %v2409, 1
        %v2412 = vor.u32 %v2407, %v2411
        %v2414 = vshrl.u32 %v2219, 16
        %v2416 = vshll.u32 %v2219, 16
        %v2418 = vrot.slane %v2416, 1
        %v2419 = vor.u32 %v2414, %v2418
        %v2421 = vshrl.u32 %v2220, 16
        %v2423 = vshll.u32 %v2220, 16
        %v2425 = vrot.slane %v2423, 1
        %v2426 = vor.u32 %v2421, %v2425
        %v2428 = vshrl.u32 %v2221, 16
        %v2430 = vshll.u32 %v2221, 16
        %v2432 = vrot.slane %v2430, 1
        %v2433 = vor.u32 %v2428, %v2432
        %v2435 = vshrl.u32 %v2222, 16
        %v2437 = vshll.u32 %v2222, 16
        %v2439 = vrot.slane %v2437, 1
        %v2440 = vor.u32 %v2435, %v2439
        %v2442 = vshrl.u32 %v2223, 16
        %v2444 = vshll.u32 %v2223, 16
        %v2446 = vrot.slane %v2444, 1
        %v2447 = vor.u32 %v2442, %v2446
        %2448 = vrot.lane.b32.xlu0 %v2230, 32
        %v2449 = vpop.permute.xlu0 %2448
        %2450 = vrot.lane.b32.xlu0 %v2237, 32
        %v2451 = vpop.permute.xlu0 %2450
        %2452 = vrot.lane.b32.xlu0 %v2244, 32
        %v2453 = vpop.permute.xlu0 %2452
        %2454 = vrot.lane.b32.xlu0 %v2251, 32
        %v2455 = vpop.permute.xlu0 %2454
        %2456 = vrot.lane.b32.xlu0 %v2258, 32
        %v2457 = vpop.permute.xlu0 %2456
        %2458 = vrot.lane.b32.xlu0 %v2265, 32
        %v2459 = vpop.permute.xlu0 %2458
        %2460 = vrot.lane.b32.xlu0 %v2272, 32
        %v2461 = vpop.permute.xlu0 %2460
        %2462 = vrot.lane.b32.xlu0 %v2279, 32
        %v2463 = vpop.permute.xlu0 %2462
        %2464 = vrot.lane.b32.xlu0 %v2286, 32
        %v2465 = vpop.permute.xlu0 %2464
        %2466 = vrot.lane.b32.xlu0 %v2293, 32
        %v2467 = vpop.permute.xlu0 %2466
        %2468 = vrot.lane.b32.xlu0 %v2300, 32
        %v2469 = vpop.permute.xlu0 %2468
        %2470 = vrot.lane.b32.xlu0 %v2307, 32
        %v2471 = vpop.permute.xlu0 %2470
        %2472 = vrot.lane.b32.xlu0 %v2314, 32
        %v2473 = vpop.permute.xlu0 %2472
        %2474 = vrot.lane.b32.xlu0 %v2321, 32
        %v2475 = vpop.permute.xlu0 %2474
        %2476 = vrot.lane.b32.xlu0 %v2328, 32
        %v2477 = vpop.permute.xlu0 %2476
        %2478 = vrot.lane.b32.xlu0 %v2335, 32
        %v2479 = vpop.permute.xlu0 %2478
        %2480 = vrot.lane.b32.xlu0 %v2342, 32
        %v2481 = vpop.permute.xlu0 %2480
        %2482 = vrot.lane.b32.xlu0 %v2349, 32
        %v2483 = vpop.permute.xlu0 %2482
        %2484 = vrot.lane.b32.xlu0 %v2356, 32
        %v2485 = vpop.permute.xlu0 %2484
        %2486 = vrot.lane.b32.xlu0 %v2363, 32
        %v2487 = vpop.permute.xlu0 %2486
        %2488 = vrot.lane.b32.xlu0 %v2370, 32
        %v2489 = vpop.permute.xlu0 %2488
        %2490 = vrot.lane.b32.xlu0 %v2377, 32
        %v2491 = vpop.permute.xlu0 %2490
        %2492 = vrot.lane.b32.xlu0 %v2384, 32
        %v2493 = vpop.permute.xlu0 %2492
        %2494 = vrot.lane.b32.xlu0 %v2391, 32
        %v2495 = vpop.permute.xlu0 %2494
        %2496 = vrot.lane.b32.xlu0 %v2398, 32
        %v2497 = vpop.permute.xlu0 %2496
        %2498 = vrot.lane.b32.xlu0 %v2405, 32
        %v2499 = vpop.permute.xlu0 %2498
        %2500 = vrot.lane.b32.xlu0 %v2412, 32
        %v2501 = vpop.permute.xlu0 %2500
        %2502 = vrot.lane.b32.xlu0 %v2419, 32
        %v2503 = vpop.permute.xlu0 %2502
        %2504 = vrot.lane.b32.xlu0 %v2426, 32
        %v2505 = vpop.permute.xlu0 %2504
        %2506 = vrot.lane.b32.xlu0 %v2433, 32
        %v2507 = vpop.permute.xlu0 %2506
        %2508 = vrot.lane.b32.xlu0 %v2440, 32
        %v2509 = vpop.permute.xlu0 %2508
        %2510 = vrot.lane.b32.xlu0 %v2447, 32
        %v2511 = vpop.permute.xlu0 %2510
        %v2512 = vrot.slane %v2192, 1
        %v2513 = vrot.slane %v2193, 1
        %v2514 = vrot.slane %v2194, 1
        %v2515 = vrot.slane %v2195, 1
        %v2516 = vrot.slane %v2196, 1
        %v2517 = vrot.slane %v2197, 1
        %v2518 = vrot.slane %v2198, 1
        %v2519 = vrot.slane %v2199, 1
        %v2520 = vrot.slane %v2200, 1
        %v2521 = vrot.slane %v2201, 1
        %v2522 = vrot.slane %v2202, 1
        %v2523 = vrot.slane %v2203, 1
        %v2524 = vrot.slane %v2204, 1
        %v2525 = vrot.slane %v2205, 1
        %v2526 = vrot.slane %v2206, 1
        %v2527 = vrot.slane %v2207, 1
        %v2528 = vrot.slane %v2208, 1
        %v2529 = vrot.slane %v2209, 1
        %v2530 = vrot.slane %v2210, 1
        %v2531 = vrot.slane %v2211, 1
        %v2532 = vrot.slane %v2212, 1
        %v2533 = vrot.slane %v2213, 1
        %v2534 = vrot.slane %v2214, 1
        %v2535 = vrot.slane %v2215, 1
        %v2536 = vrot.slane %v2216, 1
        %v2537 = vrot.slane %v2217, 1
        %v2538 = vrot.slane %v2218, 1
        %v2539 = vrot.slane %v2219, 1
        %v2540 = vrot.slane %v2220, 1
        %v2541 = vrot.slane %v2221, 1
        %v2542 = vrot.slane %v2222, 1
        %v2543 = vrot.slane %v2223, 1
        %2544 = vrot.lane.b32.xlu0 %v2512, 64
        %v2545 = vpop.permute.xlu0 %2544
        %2546 = vrot.lane.b32.xlu0 %v2513, 64
        %v2547 = vpop.permute.xlu0 %2546
        %2548 = vrot.lane.b32.xlu0 %v2514, 64
        %v2549 = vpop.permute.xlu0 %2548
        %2550 = vrot.lane.b32.xlu0 %v2515, 64
        %v2551 = vpop.permute.xlu0 %2550
        %2552 = vrot.lane.b32.xlu0 %v2516, 64
        %v2553 = vpop.permute.xlu0 %2552
        %2554 = vrot.lane.b32.xlu0 %v2517, 64
        %v2555 = vpop.permute.xlu0 %2554
        %2556 = vrot.lane.b32.xlu0 %v2518, 64
        %v2557 = vpop.permute.xlu0 %2556
        %2558 = vrot.lane.b32.xlu0 %v2519, 64
        %v2559 = vpop.permute.xlu0 %2558
        %2560 = vrot.lane.b32.xlu0 %v2520, 64
        %v2561 = vpop.permute.xlu0 %2560
        %2562 = vrot.lane.b32.xlu0 %v2521, 64
        %v2563 = vpop.permute.xlu0 %2562
        %2564 = vrot.lane.b32.xlu0 %v2522, 64
        %v2565 = vpop.permute.xlu0 %2564
        %2566 = vrot.lane.b32.xlu0 %v2523, 64
        %v2567 = vpop.permute.xlu0 %2566
        %2568 = vrot.lane.b32.xlu0 %v2524, 64
        %v2569 = vpop.permute.xlu0 %2568
        %2570 = vrot.lane.b32.xlu0 %v2525, 64
        %v2571 = vpop.permute.xlu0 %2570
        %2572 = vrot.lane.b32.xlu0 %v2526, 64
        %v2573 = vpop.permute.xlu0 %2572
        %2574 = vrot.lane.b32.xlu0 %v2527, 64
        %v2575 = vpop.permute.xlu0 %2574
        %2576 = vrot.lane.b32.xlu0 %v2528, 64
        %v2577 = vpop.permute.xlu0 %2576
        %2578 = vrot.lane.b32.xlu0 %v2529, 64
        %v2579 = vpop.permute.xlu0 %2578
        %2580 = vrot.lane.b32.xlu0 %v2530, 64
        %v2581 = vpop.permute.xlu0 %2580
        %2582 = vrot.lane.b32.xlu0 %v2531, 64
        %v2583 = vpop.permute.xlu0 %2582
        %2584 = vrot.lane.b32.xlu0 %v2532, 64
        %v2585 = vpop.permute.xlu0 %2584
        %2586 = vrot.lane.b32.xlu0 %v2533, 64
        %v2587 = vpop.permute.xlu0 %2586
        %2588 = vrot.lane.b32.xlu0 %v2534, 64
        %v2589 = vpop.permute.xlu0 %2588
        %2590 = vrot.lane.b32.xlu0 %v2535, 64
        %v2591 = vpop.permute.xlu0 %2590
        %2592 = vrot.lane.b32.xlu0 %v2536, 64
        %v2593 = vpop.permute.xlu0 %2592
        %2594 = vrot.lane.b32.xlu0 %v2537, 64
        %v2595 = vpop.permute.xlu0 %2594
        %2596 = vrot.lane.b32.xlu0 %v2538, 64
        %v2597 = vpop.permute.xlu0 %2596
        %2598 = vrot.lane.b32.xlu0 %v2539, 64
        %v2599 = vpop.permute.xlu0 %2598
        %2600 = vrot.lane.b32.xlu0 %v2540, 64
        %v2601 = vpop.permute.xlu0 %2600
        %2602 = vrot.lane.b32.xlu0 %v2541, 64
        %v2603 = vpop.permute.xlu0 %2602
        %2604 = vrot.lane.b32.xlu0 %v2542, 64
        %v2605 = vpop.permute.xlu0 %2604
        %2606 = vrot.lane.b32.xlu0 %v2543, 64
        %v2607 = vpop.permute.xlu0 %2606
        %v2610 = vsel %vm1126, %v2000, %v2449
        %v2613 = vsel %vm1126, %v2002, %v2451
        %v2616 = vsel %vm1126, %v2004, %v2453
        %v2619 = vsel %vm1126, %v2006, %v2455
        %v2622 = vsel %vm1126, %v2008, %v2457
        %v2625 = vsel %vm1126, %v2010, %v2459
        %v2628 = vsel %vm1126, %v2012, %v2461
        %v2631 = vsel %vm1126, %v2014, %v2463
        %v2634 = vsel %vm1126, %v2016, %v2465
        %v2637 = vsel %vm1126, %v2018, %v2467
        %v2640 = vsel %vm1126, %v2020, %v2469
        %v2643 = vsel %vm1126, %v2022, %v2471
        %v2646 = vsel %vm1126, %v2024, %v2473
        %v2649 = vsel %vm1126, %v2026, %v2475
        %v2652 = vsel %vm1126, %v2028, %v2477
        %v2655 = vsel %vm1126, %v2030, %v2479
        %v2658 = vsel %vm1126, %v2032, %v2481
        %v2661 = vsel %vm1126, %v2034, %v2483
        %v2664 = vsel %vm1126, %v2036, %v2485
        %v2667 = vsel %vm1126, %v2038, %v2487
        %v2670 = vsel %vm1126, %v2040, %v2489
        %v2673 = vsel %vm1126, %v2042, %v2491
        %v2676 = vsel %vm1126, %v2044, %v2493
        %v2679 = vsel %vm1126, %v2046, %v2495
        %v2682 = vsel %vm1126, %v2048, %v2497
        %v2685 = vsel %vm1126, %v2050, %v2499
        %v2688 = vsel %vm1126, %v2052, %v2501
        %v2691 = vsel %vm1126, %v2054, %v2503
        %v2694 = vsel %vm1126, %v2056, %v2505
        %v2697 = vsel %vm1126, %v2058, %v2507
        %v2700 = vsel %vm1126, %v2060, %v2509
        %v2703 = vsel %vm1126, %v2062, %v2511
        %v2705 = vsel %vm1223, %v2610, %v2545
        %v2707 = vsel %vm1223, %v2613, %v2547
        %v2709 = vsel %vm1223, %v2616, %v2549
        %v2711 = vsel %vm1223, %v2619, %v2551
        %v2713 = vsel %vm1223, %v2622, %v2553
        %v2715 = vsel %vm1223, %v2625, %v2555
        %v2717 = vsel %vm1223, %v2628, %v2557
        %v2719 = vsel %vm1223, %v2631, %v2559
        %v2721 = vsel %vm1223, %v2634, %v2561
        %v2723 = vsel %vm1223, %v2637, %v2563
        %v2725 = vsel %vm1223, %v2640, %v2565
        %v2727 = vsel %vm1223, %v2643, %v2567
        %v2729 = vsel %vm1223, %v2646, %v2569
        %v2731 = vsel %vm1223, %v2649, %v2571
        %v2733 = vsel %vm1223, %v2652, %v2573
        %v2735 = vsel %vm1223, %v2655, %v2575
        %v2737 = vsel %vm1223, %v2658, %v2577
        %v2739 = vsel %vm1223, %v2661, %v2579
        %v2741 = vsel %vm1223, %v2664, %v2581
        %v2743 = vsel %vm1223, %v2667, %v2583
        %v2745 = vsel %vm1223, %v2670, %v2585
        %v2747 = vsel %vm1223, %v2673, %v2587
        %v2749 = vsel %vm1223, %v2676, %v2589
        %v2751 = vsel %vm1223, %v2679, %v2591
        %v2753 = vsel %vm1223, %v2682, %v2593
        %v2755 = vsel %vm1223, %v2685, %v2595
        %v2757 = vsel %vm1223, %v2688, %v2597
        %v2759 = vsel %vm1223, %v2691, %v2599
        %v2761 = vsel %vm1223, %v2694, %v2601
        %v2763 = vsel %vm1223, %v2697, %v2603
        %v2765 = vsel %vm1223, %v2700, %v2605
        %v2767 = vsel %vm1223, %v2703, %v2607
        %v2768 = vld [vmem:[%s320] sm:$0xf]
        %v2769 = vld [vmem:[%s320 + $0x4] sm:$0xf]
        %v2770 = vld [vmem:[%s320 + $0x8] sm:$0xf]
        %v2771 = vld [vmem:[%s320 + $0xc] sm:$0xf]
        %v2772 = vld [vmem:[%s320 + $0x10] sm:$0xf]
        %v2773 = vld [vmem:[%s320 + $0x14] sm:$0xf]
        %v2774 = vld [vmem:[%s320 + $0x18] sm:$0xf]
        %v2775 = vld [vmem:[%s320 + $0x1c] sm:$0xf]
        %v2776 = vld [vmem:[%s320 + $0x20] sm:$0xf]
        %v2777 = vld [vmem:[%s320 + $0x24] sm:$0xf]
        %v2778 = vld [vmem:[%s320 + $0x28] sm:$0xf]
        %v2779 = vld [vmem:[%s320 + $0x2c] sm:$0xf]
        %v2780 = vld [vmem:[%s323] sm:$0x1]
        %v2782 = vperm.slane %v2780, 0
        %v2816 = vunpack.c.l.b16 %v2705
        %v2817 = vunpack.c.l.b16 %v2707
        %v2818 = vunpack.c.l.b16 %v2709
        %v2819 = vunpack.c.l.b16 %v2711
        %v2820 = vunpack.c.l.b16 %v2713
        %v2821 = vunpack.c.l.b16 %v2715
        %v2822 = vunpack.c.l.b16 %v2717
        %v2823 = vunpack.c.l.b16 %v2719
        %v2824 = vunpack.c.l.b16 %v2721
        %v2825 = vunpack.c.l.b16 %v2723
        %v2826 = vunpack.c.l.b16 %v2725
        %v2827 = vunpack.c.l.b16 %v2727
        %v2828 = vunpack.c.l.b16 %v2729
        %v2829 = vunpack.c.l.b16 %v2731
        %v2830 = vunpack.c.l.b16 %v2733
        %v2831 = vunpack.c.l.b16 %v2735
        %v2832 = vunpack.c.l.b16 %v2737
        %v2833 = vunpack.c.l.b16 %v2739
        %v2834 = vunpack.c.l.b16 %v2741
        %v2835 = vunpack.c.l.b16 %v2743
        %v2836 = vunpack.c.l.b16 %v2745
        %v2837 = vunpack.c.l.b16 %v2747
        %v2838 = vunpack.c.l.b16 %v2749
        %v2839 = vunpack.c.l.b16 %v2751
        %v2840 = vunpack.c.l.b16 %v2753
        %v2841 = vunpack.c.l.b16 %v2755
        %v2842 = vunpack.c.l.b16 %v2757
        %v2843 = vunpack.c.l.b16 %v2759
        %v2844 = vunpack.c.l.b16 %v2761
        %v2845 = vunpack.c.l.b16 %v2763
        %v2846 = vunpack.c.l.b16 %v2765
        %v2847 = vunpack.c.l.b16 %v2767
        %v2848 = vpack.c.b16 %v2817, %v2816
        %v2849 = vpack.c.b16 %v2819, %v2818
        %v2850 = vpack.c.b16 %v2821, %v2820
        %v2851 = vpack.c.b16 %v2823, %v2822
        %v2852 = vpack.c.b16 %v2825, %v2824
        %v2853 = vpack.c.b16 %v2827, %v2826
        %v2854 = vpack.c.b16 %v2829, %v2828
        %v2855 = vpack.c.b16 %v2831, %v2830
        %v2856 = vpack.c.b16 %v2833, %v2832
        %v2857 = vpack.c.b16 %v2835, %v2834
        %v2858 = vpack.c.b16 %v2837, %v2836
        %v2859 = vpack.c.b16 %v2839, %v2838
        %v2860 = vpack.c.b16 %v2841, %v2840
        %v2861 = vpack.c.b16 %v2843, %v2842
        %v2862 = vpack.c.b16 %v2845, %v2844
        %v2863 = vpack.c.b16 %v2847, %v2846
        %v2876 = vunpack.c.l.b16 %v2768
        %v2877 = vunpack.c.l.b16 %v2769
        %v2878 = vunpack.c.l.b16 %v2770
        %v2879 = vunpack.c.l.b16 %v2771
        %v2880 = vunpack.c.l.b16 %v2772
        %v2881 = vunpack.c.l.b16 %v2773
        %v2882 = vunpack.c.l.b16 %v2774
        %v2883 = vunpack.c.l.b16 %v2775
        %v2884 = vunpack.c.l.b16 %v2776
        %v2885 = vunpack.c.l.b16 %v2777
        %v2886 = vunpack.c.l.b16 %v2778
        %v2887 = vunpack.c.l.b16 %v2779
        %v2888 = vpack.c.b16 %v2877, %v2876
        %v2889 = vpack.c.b16 %v2879, %v2878
        %v2890 = vpack.c.b16 %v2881, %v2880
        %v2891 = vpack.c.b16 %v2883, %v2882
        %v2892 = vpack.c.b16 %v2885, %v2884
        %v2893 = vpack.c.b16 %v2887, %v2886
        %v2901 = vsel %vm1288, %v2848, 0
        %v2904 = vsel %vm1288, %v2849, 0
        %v2907 = vsel %vm1288, %v2850, 0
        %v2910 = vsel %vm1288, %v2851, 0
        %v2913 = vsel %vm1288, %v2852, 0
        %v2916 = vsel %vm1288, %v2853, 0
        %v2919 = vsel %vm1288, %v2854, 0
        %v2922 = vsel %vm1288, %v2855, 0
        %v2925 = vsel %vm1288, %v2856, 0
        %v2928 = vsel %vm1288, %v2857, 0
        %v2931 = vsel %vm1288, %v2858, 0
        %v2934 = vsel %vm1288, %v2859, 0
        %v2937 = vsel %vm1288, %v2860, 0
        %v2940 = vsel %vm1288, %v2861, 0
        %v2943 = vsel %vm1288, %v2862, 0
        %v2946 = vsel %vm1288, %v2863, 0
        %2948 = vmatpush.bf16.msra.mxu0 0
        %2949 = vmatpush.bf16.msra.mxu0 0
        %2950 = vmatpush.bf16.msra.mxu0 %v2893
        %2951 = vmatpush.bf16.msra.mxu0 %v2892
        %2952 = vmatpush.bf16.msra.mxu0 %v2891
        %2953 = vmatpush.bf16.msra.mxu0 %v2890
        %2954 = vmatpush.bf16.msra.mxu0 %v2889
        %2955 = vmatpush.bf16.msra.mxu0 %v2888
        %2956 = vmatmul.bf16.gmra.mxu0 %v2901
        %v2957 = vpop.f32.mrf.mxu0
        %v2958 = vadd.f32 %v2782, %v2957
        %v2959 = vpop.f32.mrf.mxu0
        %v2960 = vadd.f32 %v2782, %v2959
        %2961 = vmatmul.bf16.gmra.mxu0 %v2904
        %v2962 = vpop.f32.mrf.mxu0
        %v2963 = vadd.f32 %v2782, %v2962
        %v2964 = vpop.f32.mrf.mxu0
        %v2965 = vadd.f32 %v2782, %v2964
        %2966 = vmatmul.bf16.gmra.mxu0 %v2907
        %v2967 = vpop.f32.mrf.mxu0
        %v2968 = vadd.f32 %v2782, %v2967
        %v2969 = vpop.f32.mrf.mxu0
        %v2970 = vadd.f32 %v2782, %v2969
        %2971 = vmatmul.bf16.gmra.mxu0 %v2910
        %v2972 = vpop.f32.mrf.mxu0
        %v2973 = vadd.f32 %v2782, %v2972
        %v2974 = vpop.f32.mrf.mxu0
        %v2975 = vadd.f32 %v2782, %v2974
        %2976 = vmatmul.bf16.gmra.mxu0 %v2913
        %v2977 = vpop.f32.mrf.mxu0
        %v2978 = vadd.f32 %v2782, %v2977
        %v2979 = vpop.f32.mrf.mxu0
        %v2980 = vadd.f32 %v2782, %v2979
        %2981 = vmatmul.bf16.gmra.mxu0 %v2916
        %v2982 = vpop.f32.mrf.mxu0
        %v2983 = vadd.f32 %v2782, %v2982
        %v2984 = vpop.f32.mrf.mxu0
        %v2985 = vadd.f32 %v2782, %v2984
        %2986 = vmatmul.bf16.gmra.mxu0 %v2919
        %v2987 = vpop.f32.mrf.mxu0
        %v2988 = vadd.f32 %v2782, %v2987
        %v2989 = vpop.f32.mrf.mxu0
        %v2990 = vadd.f32 %v2782, %v2989
        %2991 = vmatmul.bf16.gmra.mxu0 %v2922
        %v2992 = vpop.f32.mrf.mxu0
        %v2993 = vadd.f32 %v2782, %v2992
        %v2994 = vpop.f32.mrf.mxu0
        %v2995 = vadd.f32 %v2782, %v2994
        %2996 = vmatmul.bf16.gmra.mxu0 %v2925
        %v2997 = vpop.f32.mrf.mxu0
        %v2998 = vadd.f32 %v2782, %v2997
        %v2999 = vpop.f32.mrf.mxu0
        %v3000 = vadd.f32 %v2782, %v2999
        %3001 = vmatmul.bf16.gmra.mxu0 %v2928
        %v3002 = vpop.f32.mrf.mxu0
        %v3003 = vadd.f32 %v2782, %v3002
        %v3004 = vpop.f32.mrf.mxu0
        %v3005 = vadd.f32 %v2782, %v3004
        %3006 = vmatmul.bf16.gmra.mxu0 %v2931
        %v3007 = vpop.f32.mrf.mxu0
        %v3008 = vadd.f32 %v2782, %v3007
        %v3009 = vpop.f32.mrf.mxu0
        %v3010 = vadd.f32 %v2782, %v3009
        %3011 = vmatmul.bf16.gmra.mxu0 %v2934
        %v3012 = vpop.f32.mrf.mxu0
        %v3013 = vadd.f32 %v2782, %v3012
        %v3014 = vpop.f32.mrf.mxu0
        %v3015 = vadd.f32 %v2782, %v3014
        %3016 = vmatmul.bf16.gmra.mxu0 %v2937
        %v3017 = vpop.f32.mrf.mxu0
        %v3018 = vadd.f32 %v2782, %v3017
        %v3019 = vpop.f32.mrf.mxu0
        %v3020 = vadd.f32 %v2782, %v3019
        %3021 = vmatmul.bf16.gmra.mxu0 %v2940
        %v3022 = vpop.f32.mrf.mxu0
        %v3023 = vadd.f32 %v2782, %v3022
        %v3024 = vpop.f32.mrf.mxu0
        %v3025 = vadd.f32 %v2782, %v3024
        %3026 = vmatmul.bf16.gmra.mxu0 %v2943
        %v3027 = vpop.f32.mrf.mxu0
        %v3028 = vadd.f32 %v2782, %v3027
        %v3029 = vpop.f32.mrf.mxu0
        %v3030 = vadd.f32 %v2782, %v3029
        %3031 = vmatmul.bf16.gmra.mxu0 %v2946
        %v3032 = vpop.f32.mrf.mxu0
        %v3033 = vadd.f32 %v2782, %v3032
        %v3034 = vpop.f32.mrf.mxu0
        %v3035 = vadd.f32 %v2782, %v3034
        %3036 = vdwg.mxu0
        %v3037 = vmax.f32 %v2958, 0.0
        %v3038 = vmax.f32 %v2960, 0.0
        %v3039 = vmax.f32 %v2963, 0.0
        %v3040 = vmax.f32 %v2965, 0.0
        %v3041 = vmax.f32 %v2968, 0.0
        %v3042 = vmax.f32 %v2970, 0.0
        %v3043 = vmax.f32 %v2973, 0.0
        %v3044 = vmax.f32 %v2975, 0.0
        %v3045 = vmax.f32 %v2978, 0.0
        %v3046 = vmax.f32 %v2980, 0.0
        %v3047 = vmax.f32 %v2983, 0.0
        %v3048 = vmax.f32 %v2985, 0.0
        %v3049 = vmax.f32 %v2988, 0.0
        %v3050 = vmax.f32 %v2990, 0.0
        %v3051 = vmax.f32 %v2993, 0.0
        %v3052 = vmax.f32 %v2995, 0.0
        %v3053 = vmax.f32 %v2998, 0.0
        %v3054 = vmax.f32 %v3000, 0.0
        %v3055 = vmax.f32 %v3003, 0.0
        %v3056 = vmax.f32 %v3005, 0.0
        %v3057 = vmax.f32 %v3008, 0.0
        %v3058 = vmax.f32 %v3010, 0.0
        %v3059 = vmax.f32 %v3013, 0.0
        %v3060 = vmax.f32 %v3015, 0.0
        %v3061 = vmax.f32 %v3018, 0.0
        %v3062 = vmax.f32 %v3020, 0.0
        %v3063 = vmax.f32 %v3023, 0.0
        %v3064 = vmax.f32 %v3025, 0.0
        %v3065 = vmax.f32 %v3028, 0.0
        %v3066 = vmax.f32 %v3030, 0.0
        %v3067 = vmax.f32 %v3033, 0.0
        %v3068 = vmax.f32 %v3035, 0.0
        %v3069 = vsel %vm1126, %v3037, -inf
        %v3070 = vrot.slane %v3069, 4
        %v3071 = vmax.f32 %v3069, %v3070
        %v3072 = vrot.slane %v3071, 2
        %v3073 = vmax.f32 %v3071, %v3072
        %v3074 = vrot.slane %v3073, 1
        %v3075 = vmax.f32 %v3073, %v3074
        %v3076 = vsel %vm1126, %v3038, -inf
        %v3077 = vrot.slane %v3076, 4
        %v3078 = vmax.f32 %v3076, %v3077
        %v3079 = vrot.slane %v3078, 2
        %v3080 = vmax.f32 %v3078, %v3079
        %v3081 = vrot.slane %v3080, 1
        %v3082 = vmax.f32 %v3080, %v3081
        %v3083 = vsel %vm1126, %v3039, -inf
        %v3084 = vrot.slane %v3083, 4
        %v3085 = vmax.f32 %v3083, %v3084
        %v3086 = vrot.slane %v3085, 2
        %v3087 = vmax.f32 %v3085, %v3086
        %v3088 = vrot.slane %v3087, 1
        %v3089 = vmax.f32 %v3087, %v3088
        %v3090 = vsel %vm1126, %v3040, -inf
        %v3091 = vrot.slane %v3090, 4
        %v3092 = vmax.f32 %v3090, %v3091
        %v3093 = vrot.slane %v3092, 2
        %v3094 = vmax.f32 %v3092, %v3093
        %v3095 = vrot.slane %v3094, 1
        %v3096 = vmax.f32 %v3094, %v3095
        %v3097 = vsel %vm1126, %v3041, -inf
        %v3098 = vrot.slane %v3097, 4
        %v3099 = vmax.f32 %v3097, %v3098
        %v3100 = vrot.slane %v3099, 2
        %v3101 = vmax.f32 %v3099, %v3100
        %v3102 = vrot.slane %v3101, 1
        %v3103 = vmax.f32 %v3101, %v3102
        %v3104 = vsel %vm1126, %v3042, -inf
        %v3105 = vrot.slane %v3104, 4
        %v3106 = vmax.f32 %v3104, %v3105
        %v3107 = vrot.slane %v3106, 2
        %v3108 = vmax.f32 %v3106, %v3107
        %v3109 = vrot.slane %v3108, 1
        %v3110 = vmax.f32 %v3108, %v3109
        %v3111 = vsel %vm1126, %v3043, -inf
        %v3112 = vrot.slane %v3111, 4
        %v3113 = vmax.f32 %v3111, %v3112
        %v3114 = vrot.slane %v3113, 2
        %v3115 = vmax.f32 %v3113, %v3114
        %v3116 = vrot.slane %v3115, 1
        %v3117 = vmax.f32 %v3115, %v3116
        %v3118 = vsel %vm1126, %v3044, -inf
        %v3119 = vrot.slane %v3118, 4
        %v3120 = vmax.f32 %v3118, %v3119
        %v3121 = vrot.slane %v3120, 2
        %v3122 = vmax.f32 %v3120, %v3121
        %v3123 = vrot.slane %v3122, 1
        %v3124 = vmax.f32 %v3122, %v3123
        %v3125 = vsel %vm1126, %v3045, -inf
        %v3126 = vrot.slane %v3125, 4
        %v3127 = vmax.f32 %v3125, %v3126
        %v3128 = vrot.slane %v3127, 2
        %v3129 = vmax.f32 %v3127, %v3128
        %v3130 = vrot.slane %v3129, 1
        %v3131 = vmax.f32 %v3129, %v3130
        %v3132 = vsel %vm1126, %v3046, -inf
        %v3133 = vrot.slane %v3132, 4
        %v3134 = vmax.f32 %v3132, %v3133
        %v3135 = vrot.slane %v3134, 2
        %v3136 = vmax.f32 %v3134, %v3135
        %v3137 = vrot.slane %v3136, 1
        %v3138 = vmax.f32 %v3136, %v3137
        %v3139 = vsel %vm1126, %v3047, -inf
        %v3140 = vrot.slane %v3139, 4
        %v3141 = vmax.f32 %v3139, %v3140
        %v3142 = vrot.slane %v3141, 2
        %v3143 = vmax.f32 %v3141, %v3142
        %v3144 = vrot.slane %v3143, 1
        %v3145 = vmax.f32 %v3143, %v3144
        %v3146 = vsel %vm1126, %v3048, -inf
        %v3147 = vrot.slane %v3146, 4
        %v3148 = vmax.f32 %v3146, %v3147
        %v3149 = vrot.slane %v3148, 2
        %v3150 = vmax.f32 %v3148, %v3149
        %v3151 = vrot.slane %v3150, 1
        %v3152 = vmax.f32 %v3150, %v3151
        %v3153 = vsel %vm1126, %v3049, -inf
        %v3154 = vrot.slane %v3153, 4
        %v3155 = vmax.f32 %v3153, %v3154
        %v3156 = vrot.slane %v3155, 2
        %v3157 = vmax.f32 %v3155, %v3156
        %v3158 = vrot.slane %v3157, 1
        %v3159 = vmax.f32 %v3157, %v3158
        %v3160 = vsel %vm1126, %v3050, -inf
        %v3161 = vrot.slane %v3160, 4
        %v3162 = vmax.f32 %v3160, %v3161
        %v3163 = vrot.slane %v3162, 2
        %v3164 = vmax.f32 %v3162, %v3163
        %v3165 = vrot.slane %v3164, 1
        %v3166 = vmax.f32 %v3164, %v3165
        %v3167 = vsel %vm1126, %v3051, -inf
        %v3168 = vrot.slane %v3167, 4
        %v3169 = vmax.f32 %v3167, %v3168
        %v3170 = vrot.slane %v3169, 2
        %v3171 = vmax.f32 %v3169, %v3170
        %v3172 = vrot.slane %v3171, 1
        %v3173 = vmax.f32 %v3171, %v3172
        %v3174 = vsel %vm1126, %v3052, -inf
        %v3175 = vrot.slane %v3174, 4
        %v3176 = vmax.f32 %v3174, %v3175
        %v3177 = vrot.slane %v3176, 2
        %v3178 = vmax.f32 %v3176, %v3177
        %v3179 = vrot.slane %v3178, 1
        %v3180 = vmax.f32 %v3178, %v3179
        %v3181 = vsel %vm1126, %v3053, -inf
        %v3182 = vrot.slane %v3181, 4
        %v3183 = vmax.f32 %v3181, %v3182
        %v3184 = vrot.slane %v3183, 2
        %v3185 = vmax.f32 %v3183, %v3184
        %v3186 = vrot.slane %v3185, 1
        %v3187 = vmax.f32 %v3185, %v3186
        %v3188 = vsel %vm1126, %v3054, -inf
        %v3189 = vrot.slane %v3188, 4
        %v3190 = vmax.f32 %v3188, %v3189
        %v3191 = vrot.slane %v3190, 2
        %v3192 = vmax.f32 %v3190, %v3191
        %v3193 = vrot.slane %v3192, 1
        %v3194 = vmax.f32 %v3192, %v3193
        %v3195 = vsel %vm1126, %v3055, -inf
        %v3196 = vrot.slane %v3195, 4
        %v3197 = vmax.f32 %v3195, %v3196
        %v3198 = vrot.slane %v3197, 2
        %v3199 = vmax.f32 %v3197, %v3198
        %v3200 = vrot.slane %v3199, 1
        %v3201 = vmax.f32 %v3199, %v3200
        %v3202 = vsel %vm1126, %v3056, -inf
        %v3203 = vrot.slane %v3202, 4
        %v3204 = vmax.f32 %v3202, %v3203
        %v3205 = vrot.slane %v3204, 2
        %v3206 = vmax.f32 %v3204, %v3205
        %v3207 = vrot.slane %v3206, 1
        %v3208 = vmax.f32 %v3206, %v3207
        %v3209 = vsel %vm1126, %v3057, -inf
        %v3210 = vrot.slane %v3209, 4
        %v3211 = vmax.f32 %v3209, %v3210
        %v3212 = vrot.slane %v3211, 2
        %v3213 = vmax.f32 %v3211, %v3212
        %v3214 = vrot.slane %v3213, 1
        %v3215 = vmax.f32 %v3213, %v3214
        %v3216 = vsel %vm1126, %v3058, -inf
        %v3217 = vrot.slane %v3216, 4
        %v3218 = vmax.f32 %v3216, %v3217
        %v3219 = vrot.slane %v3218, 2
        %v3220 = vmax.f32 %v3218, %v3219
        %v3221 = vrot.slane %v3220, 1
        %v3222 = vmax.f32 %v3220, %v3221
        %v3223 = vsel %vm1126, %v3059, -inf
        %v3224 = vrot.slane %v3223, 4
        %v3225 = vmax.f32 %v3223, %v3224
        %v3226 = vrot.slane %v3225, 2
        %v3227 = vmax.f32 %v3225, %v3226
        %v3228 = vrot.slane %v3227, 1
        %v3229 = vmax.f32 %v3227, %v3228
        %v3230 = vsel %vm1126, %v3060, -inf
        %v3231 = vrot.slane %v3230, 4
        %v3232 = vmax.f32 %v3230, %v3231
        %v3233 = vrot.slane %v3232, 2
        %v3234 = vmax.f32 %v3232, %v3233
        %v3235 = vrot.slane %v3234, 1
        %v3236 = vmax.f32 %v3234, %v3235
        %v3237 = vsel %vm1126, %v3061, -inf
        %v3238 = vrot.slane %v3237, 4
        %v3239 = vmax.f32 %v3237, %v3238
        %v3240 = vrot.slane %v3239, 2
        %v3241 = vmax.f32 %v3239, %v3240
        %v3242 = vrot.slane %v3241, 1
        %v3243 = vmax.f32 %v3241, %v3242
        %v3244 = vsel %vm1126, %v3062, -inf
        %v3245 = vrot.slane %v3244, 4
        %v3246 = vmax.f32 %v3244, %v3245
        %v3247 = vrot.slane %v3246, 2
        %v3248 = vmax.f32 %v3246, %v3247
        %v3249 = vrot.slane %v3248, 1
        %v3250 = vmax.f32 %v3248, %v3249
        %v3251 = vsel %vm1126, %v3063, -inf
        %v3252 = vrot.slane %v3251, 4
        %v3253 = vmax.f32 %v3251, %v3252
        %v3254 = vrot.slane %v3253, 2
        %v3255 = vmax.f32 %v3253, %v3254
        %v3256 = vrot.slane %v3255, 1
        %v3257 = vmax.f32 %v3255, %v3256
        %v3258 = vsel %vm1126, %v3064, -inf
        %v3259 = vrot.slane %v3258, 4
        %v3260 = vmax.f32 %v3258, %v3259
        %v3261 = vrot.slane %v3260, 2
        %v3262 = vmax.f32 %v3260, %v3261
        %v3263 = vrot.slane %v3262, 1
        %v3264 = vmax.f32 %v3262, %v3263
        %v3265 = vsel %vm1126, %v3065, -inf
        %v3266 = vrot.slane %v3265, 4
        %v3267 = vmax.f32 %v3265, %v3266
        %v3268 = vrot.slane %v3267, 2
        %v3269 = vmax.f32 %v3267, %v3268
        %v3270 = vrot.slane %v3269, 1
        %v3271 = vmax.f32 %v3269, %v3270
        %v3272 = vsel %vm1126, %v3066, -inf
        %v3273 = vrot.slane %v3272, 4
        %v3274 = vmax.f32 %v3272, %v3273
        %v3275 = vrot.slane %v3274, 2
        %v3276 = vmax.f32 %v3274, %v3275
        %v3277 = vrot.slane %v3276, 1
        %v3278 = vmax.f32 %v3276, %v3277
        %v3279 = vsel %vm1126, %v3067, -inf
        %v3280 = vrot.slane %v3279, 4
        %v3281 = vmax.f32 %v3279, %v3280
        %v3282 = vrot.slane %v3281, 2
        %v3283 = vmax.f32 %v3281, %v3282
        %v3284 = vrot.slane %v3283, 1
        %v3285 = vmax.f32 %v3283, %v3284
        %v3286 = vsel %vm1126, %v3068, -inf
        %v3287 = vrot.slane %v3286, 4
        %v3288 = vmax.f32 %v3286, %v3287
        %v3289 = vrot.slane %v3288, 2
        %v3290 = vmax.f32 %v3288, %v3289
        %v3291 = vrot.slane %v3290, 1
        %v3292 = vmax.f32 %v3290, %v3291
        %vm3325 = vcmask 1041409
        %v3326 = vsel %vm3325, %v3082, %v3075
        %vm3327 = vcmask 1042434
        %v3328 = vsel %vm3327, %v3089, %v3326
        %vm3329 = vcmask 1043459
        %v3330 = vsel %vm3329, %v3096, %v3328
        %vm3331 = vcmask 1044484
        %v3332 = vsel %vm3331, %v3103, %v3330
        %vm3333 = vcmask 1045509
        %v3334 = vsel %vm3333, %v3110, %v3332
        %vm3335 = vcmask 1046534
        %v3336 = vsel %vm3335, %v3117, %v3334
        %vm3337 = vcmask 1047559
        %v3338 = vsel %vm3337, %v3124, %v3336
        %v3339 = vsel %vm3325, %v3138, %v3131
        %v3340 = vsel %vm3327, %v3145, %v3339
        %v3341 = vsel %vm3329, %v3152, %v3340
        %v3342 = vsel %vm3331, %v3159, %v3341
        %v3343 = vsel %vm3333, %v3166, %v3342
        %v3344 = vsel %vm3335, %v3173, %v3343
        %v3345 = vsel %vm3337, %v3180, %v3344
        %v3346 = vsel %vm3325, %v3194, %v3187
        %v3347 = vsel %vm3327, %v3201, %v3346
        %v3348 = vsel %vm3329, %v3208, %v3347
        %v3349 = vsel %vm3331, %v3215, %v3348
        %v3350 = vsel %vm3333, %v3222, %v3349
        %v3351 = vsel %vm3335, %v3229, %v3350
        %v3352 = vsel %vm3337, %v3236, %v3351
        %v3353 = vsel %vm3325, %v3250, %v3243
        %v3354 = vsel %vm3327, %v3257, %v3353
        %v3355 = vsel %vm3329, %v3264, %v3354
        %v3356 = vsel %vm3331, %v3271, %v3355
        %v3357 = vsel %vm3333, %v3278, %v3356
        %v3358 = vsel %vm3335, %v3285, %v3357
        %v3359 = vsel %vm3337, %v3292, %v3358
        %3364 = vst.msk [vmem:[%s296] sm:$0xff] %vm1126, %v3338
        %3365 = vst.msk [vmem:[%s296 + $0x8] sm:$0xff] %vm1126, %v3345
        %3366 = vst.msk [vmem:[%s296 + $0x10] sm:$0xff] %vm1126, %v3352
        %3367 = vst.msk [vmem:[%s296 + $0x18] sm:$0xff] %vm1126, %v3359
        %s3368 = sand.u32 %s173, 1
        %s3369 = scalar_lea.sflag [#allocation3], %s3368
        %s3370 = sand.u32 %s173, 1
        %s3371 = smul.addr %s3370, 32
        %s3372 = scalar_lea.vmem [#allocation2], %s3371
        // Predicated region
        $region41: #{tpu_custom_call.1} parent=39 // pred_check
          %p3373 = pneg %p183
        $region42: #{tpu_custom_call.1} parent=39 // pred_check_branch
          %3375 = sbr.rel (%p3373) target = $region44
        $region43: #{tpu_custom_call.1} parent=39 // pred_region
          %s3376 = smul.u32 4, %s24
          %3378 = vsyncadd %s3369, 0
          %s3379 = smul.addr %s23, 4
          %s3380 = sadd.s32 %s3376, %s3379
          %s3381 = smul.addr %s3380, 8
          %s3382 = scalar_lea.hbm %s5, %s3381
          %s3383 = sshll.u32 %s3372, 4
          %s3384 = int_to_ptr.vmem [resolvable:$true] %s3383
          %s3385 = sshll.u32 %s3382, 4
          %s3386 = int_to_ptr.hbm [resolvable:$true] %s3385
          %3391 = dma.vmem_to_hbm [thread:$0]  %s3384, 512, %s3386, %s3369, 128, 128, 8
        $region44: #{tpu_custom_call.1} parent=39 // pred_fallthru
          _
      $region40: #{tpu_custom_call.1} parent=5 // pred_fallthru
        _
      %p3392 = scmp.le.s32.totalorder 2, %s14
      // Predicated region
      $region45: #{tpu_custom_call.1} parent=5 // pred_check
        %p3393 = pneg %p3392
      $region46: #{tpu_custom_call.1} parent=5 // pred_check_branch
        %3395 = sbr.rel (%p3393) target = $region48
      $region47: #{tpu_custom_call.1} parent=5 // pred_region
        %s3396 = ssub.s32 %s14, 2
        // Predicated region
        $region49: #{tpu_custom_call.1} parent=47 // pred_check
          %p3397 = pneg %p189
        $region50: #{tpu_custom_call.1} parent=47 // pred_check_branch
          %3399 = sbr.rel (%p3397) target = $region52
        $region51: #{tpu_custom_call.1} parent=47 // pred_region
          %s3400 = sand.u32 %s174, 1
          %s3401 = scalar_lea.sflag [#allocation3], %s3400
          %s3402 = sand.u32 %s174, 1
          %s3403 = smul.addr %s3402, 32
          %s3404 = scalar_lea.vmem [#allocation2], %s3403
          %3406 = dma.done %s3401, 512
        $region52: #{tpu_custom_call.1} parent=47 // pred_fallthru
          _
      $region48: #{tpu_custom_call.1} parent=5 // pred_fallthru
        _
    $region6: #{tpu_custom_call.1} parent=1 // loop_footer
      %s18 = sadd.s32 1, %s14
    $region7: #{tpu_custom_call.1} parent=1 // loop_footer_branch
      %13 = sbr.rel target = $region3
    $region8: #{tpu_custom_call.1} parent=1 // loop_exit
      _
    %3407 = vsyncpa [#allocation3], 1
    %s3408 = scalar_lea.sflag [#allocation3], 1
    %3409 = vsyncpa %s3408, 1

</llo_original>
